<compile_context>
chip_gen: v6e
topology: v6e:2x2x1
jax: 0.10.0
libtpu: 0.0.40
codegen_flags: <defaults>
</compile_context>

<pallas_src>
import jax
import jax.numpy as jnp
from jax import lax
from jax.experimental import pallas as pl
from jax.experimental.pallas import tpu as pltpu


# ----------------------------------------------------------------------------
# Fused kernel: LSTM layer 1 -> LSTM layer 2 -> BatchNorm1d(eval) -> Linear.
# Gate order follows PyTorch nn.LSTM: [i, f, g, o].
# ----------------------------------------------------------------------------
def _make_fused_kernel(T, BP, H, eps=1e-5):
    def kernel(x_ref, wih1_ref, whh1_ref, b1_ref,
               wih2_ref, whh2_ref, b2_ref,
               gam_ref, bet_ref, mu_ref, var_ref,
               wfc_ref, bfc_ref,
               o_ref,
               pre_sc, h1_sc):
        # ---- layer 1: batched input projection for all timesteps (one MXU push) ----
        # x_ref is (T*BP, I); bias (b_ih + b_hh) folded in once, outside the loop.
        pre_sc[...] = (
            jnp.dot(x_ref[...], wih1_ref[...], preferred_element_type=jnp.float32)
            + b1_ref[...]
        )

        def recurrence(whh, h_seq_ref):
            # whh: (H, 4H) loaded once and held in vregs. Gates laid out [i|f|g|o].
            # TODO(synk): at larger H, restructure the gate layout so the 4 gate slices
            # are not 32-lane sub-slices of one 128-lane vector; at H=32 the serial
            # h @ W_hh dependency dominates and the masked slices are negligible.
            def step(t, carry):
                h, c = carry
                row = pl.multiple_of(t * BP, BP)
                gates = pre_sc[pl.ds(row, BP), :] + jnp.dot(
                    h, whh, preferred_element_type=jnp.float32)
                i_g = jax.nn.sigmoid(gates[:, 0 * H:1 * H])
                f_g = jax.nn.sigmoid(gates[:, 1 * H:2 * H])
                g_g = jnp.tanh(gates[:, 2 * H:3 * H])
                o_g = jax.nn.sigmoid(gates[:, 3 * H:4 * H])
                c_new = f_g * c + i_g * g_g
                h_new = o_g * jnp.tanh(c_new)
                if h_seq_ref is not None:
                    h_seq_ref[pl.ds(row, BP), :] = h_new
                return (h_new, c_new)

            zeros = jnp.zeros((BP, H), jnp.float32)
            return lax.fori_loop(0, T, step, (zeros, zeros), unroll=True)

        recurrence(whh1_ref[...], h1_sc)

        # ---- layer 2: batched input projection from the full layer-1 sequence ----
        pre_sc[...] = (
            jnp.dot(h1_sc[...], wih2_ref[...], preferred_element_type=jnp.float32)
            + b2_ref[...]
        )
        h2_last, _ = recurrence(whh2_ref[...], None)

        # ---- BatchNorm1d (eval, running stats) + Dropout(identity) + Linear ----
        inv = lax.rsqrt(var_ref[...] + eps)
        norm = (h2_last - mu_ref[...]) * inv * gam_ref[...] + bet_ref[...]
        o_ref[...] = (
            jnp.dot(norm, wfc_ref[...], preferred_element_type=jnp.float32)
            + bfc_ref[...]
        )

    return kernel


# ----------------------------------------------------------------------------
# Model wrapper
# ----------------------------------------------------------------------------
def lstm_model_forward(params, x_bti):
    """x_bti: (B, T, input_size), batch-first like the PyTorch module."""
    B, T, I = x_bti.shape
    H = params["w_hh1"].shape[0]
    O = params["w_fc"].shape[1]
    BP = ((B + 7) // 8) * 8                      # pad batch to a sublane multiple

    x_tbi = jnp.transpose(x_bti, (1, 0, 2))      # time-major (T, B, I)
    x_pad = jnp.pad(x_tbi, ((0, 0), (0, BP - B), (0, 0)))
    x_flat = x_pad.reshape(T * BP, I)            # (T*BP, I): layer-1 proj is one matmul

    def vmem_spec():
        return pl.BlockSpec(memory_space=pltpu.MemorySpace.VMEM)

    out_padded = pl.pallas_call(
        _make_fused_kernel(T, BP, H),
        out_shape=jax.ShapeDtypeStruct((BP, O), jnp.float32),
        in_specs=[vmem_spec() for _ in range(13)],
        out_specs=vmem_spec(),
        scratch_shapes=[
            pltpu.VMEM((T * BP, 4 * H), jnp.float32),  # precomputed gates (reused by both layers)
            pltpu.VMEM((T * BP, H), jnp.float32),      # layer-1 hidden sequence
        ],
        # TODO(synk): at scaled-up sizes add a "parallel" batch-chunk grid axis (v7x dual
        # TensorCores) and time-chunk pre_sc via pltpu.emit_pipeline for the 64 MiB VMEM
        # budget; unnecessary at these toy shapes.
    )(x_flat,
      params["w_ih1"], params["w_hh1"], params["b1"],
      params["w_ih2"], params["w_hh2"], params["b2"],
      params["bn_gamma"], params["bn_beta"], params["bn_mean"], params["bn_var"],
      params["w_fc"], params["b_fc"])
    return out_padded[:B]


def init_params(key, input_size, hidden_size, output_size):
    H = hidden_size
    ks = jax.random.split(key, 10)
    s1 = 1.0 / jnp.sqrt(H)

    def u(k, shape, s):
        return jax.random.uniform(k, shape, jnp.float32, -s, s)

    return {
        # LSTM layer 1 (stored transposed for (x @ W) kernels)
        "w_ih1": u(ks[0], (input_size, 4 * H), s1),
        "w_hh1": u(ks[1], (H, 4 * H), s1),
        "b1": u(ks[2], (1, 4 * H), s1) + u(ks[3], (1, 4 * H), s1),  # b_ih + b_hh
        # LSTM layer 2
        "w_ih2": u(ks[4], (H, 4 * H), s1),
        "w_hh2": u(ks[5], (H, 4 * H), s1),
        "b2": u(ks[6], (1, 4 * H), s1) + u(ks[7], (1, 4 * H), s1),
        # BatchNorm1d (PyTorch defaults: weight=1, bias=0, running stats 0/1)
        "bn_gamma": jnp.ones((1, H), jnp.float32),
        "bn_beta": jnp.zeros((1, H), jnp.float32),
        "bn_mean": jnp.zeros((1, H), jnp.float32),
        "bn_var": jnp.ones((1, H), jnp.float32),
        # Linear
        "w_fc": u(ks[8], (H, output_size), s1),
        "b_fc": u(ks[9], (1, output_size), s1),
    }


# ----------------------------------------------------------------------------
# Pure-JAX reference (same math) for a correctness sanity check.
# ----------------------------------------------------------------------------
def reference_forward(params, x_bti, eps=1e-5):
    def lstm_ref(x_tbi, w_ih, w_hh, b):
        T, B, _ = x_tbi.shape
        H = w_hh.shape[0]

        def step(carry, x_t):
            h, c = carry
            gates = x_t @ w_ih + h @ w_hh + b
            i = jax.nn.sigmoid(gates[:, 0 * H:1 * H])
            f = jax.nn.sigmoid(gates[:, 1 * H:2 * H])
            g = jnp.tanh(gates[:, 2 * H:3 * H])
            o = jax.nn.sigmoid(gates[:, 3 * H:4 * H])
            c = f * c + i * g
            h = o * jnp.tanh(c)
            return (h, c), h

        init = (jnp.zeros((B, H), jnp.float32), jnp.zeros((B, H), jnp.float32))
        _, hs = lax.scan(step, init, x_tbi)
        return hs

    x_tbi = jnp.transpose(x_bti, (1, 0, 2))
    h1 = lstm_ref(x_tbi, params["w_ih1"], params["w_hh1"], params["b1"])
    h2 = lstm_ref(h1, params["w_ih2"], params["w_hh2"], params["b2"])
    h_last = h2[-1]
    norm = (h_last - params["bn_mean"]) * lax.rsqrt(params["bn_var"] + eps)
    norm = norm * params["bn_gamma"] + params["bn_beta"]
    return norm @ params["w_fc"] + params["b_fc"]


if __name__ == "__main__":
    B, T, INPUT, HIDDEN, OUTPUT = 2, 8, 16, 32, 4

    key = jax.random.PRNGKey(0)
    k_params, k_x = jax.random.split(key)
    params = init_params(k_params, INPUT, HIDDEN, OUTPUT)
    x = jax.random.normal(k_x, (B, T, INPUT), jnp.float32)

    fwd = jax.jit(lstm_model_forward)
    out = jax.block_until_ready(fwd(params, x))
    ref = jax.block_until_ready(reference_forward(params, x))

    assert out.shape == (B, OUTPUT), out.shape
    assert jnp.allclose(out, ref, atol=1e-4, rtol=1e-4), (
        float(jnp.max(jnp.abs(out - ref)))
    )
    print("KERNEL_OK")
</pallas_src>

<mosaic_0001>
module attributes {stable_mosaic.version = 11 : i64} {
  func.func @kernel(%arg0: memref<64x16xf32, #tpu.memory_space<vmem>>, %arg1: memref<16x128xf32, #tpu.memory_space<vmem>>, %arg2: memref<32x128xf32, #tpu.memory_space<vmem>>, %arg3: memref<1x128xf32, #tpu.memory_space<vmem>>, %arg4: memref<32x128xf32, #tpu.memory_space<vmem>>, %arg5: memref<32x128xf32, #tpu.memory_space<vmem>>, %arg6: memref<1x128xf32, #tpu.memory_space<vmem>>, %arg7: memref<1x32xf32, #tpu.memory_space<vmem>>, %arg8: memref<1x32xf32, #tpu.memory_space<vmem>>, %arg9: memref<1x32xf32, #tpu.memory_space<vmem>>, %arg10: memref<1x32xf32, #tpu.memory_space<vmem>>, %arg11: memref<32x4xf32, #tpu.memory_space<vmem>>, %arg12: memref<1x4xf32, #tpu.memory_space<vmem>>, %arg13: memref<8x4xf32, #tpu.memory_space<vmem>>, %arg14: memref<64x128xf32, #tpu.memory_space<vmem>>, %arg15: memref<64x32xf32, #tpu.memory_space<vmem>>) attributes {dimension_semantics = [], scalar_prefetch = 0 : i64, scratch_operands = 2 : i64, tpu.core_type = #tpu.core_type<tc>} {
    %c0 = arith.constant 0 : index
    %c0_0 = arith.constant 0 : index
    %0 = vector.load %arg0[%c0, %c0_0] : memref<64x16xf32, #tpu.memory_space<vmem>>, vector<64x16xf32>
    %c0_1 = arith.constant 0 : index
    %c0_2 = arith.constant 0 : index
    %1 = vector.load %arg1[%c0_1, %c0_2] : memref<16x128xf32, #tpu.memory_space<vmem>>, vector<16x128xf32>
    %cst = arith.constant dense<0.000000e+00> : vector<64x128xf32>
    %2 = tpu.matmul %0, %1, %cst {dimension_numbers = #tpu.dot_dimension_numbers<[1], [0], [0], [1], [0, 0, 1, 1], [], []>} : vector<64x16xf32>, vector<16x128xf32>, vector<64x128xf32> -> vector<64x128xf32>
    %c0_3 = arith.constant 0 : index
    %c0_4 = arith.constant 0 : index
    %3 = vector.load %arg3[%c0_3, %c0_4] : memref<1x128xf32, #tpu.memory_space<vmem>>, vector<1x128xf32>
    %4 = vector.broadcast %3 : vector<1x128xf32> to vector<64x128xf32>
    %5 = arith.addf %2, %4 : vector<64x128xf32>
    %c0_5 = arith.constant 0 : index
    %c0_6 = arith.constant 0 : index
    %6 = vector.load %arg14[%c0_5, %c0_6] : memref<64x128xf32, #tpu.memory_space<vmem>>, vector<64x128xf32>
    tpu.vector_store %arg14[%c0_5, %c0_6], %5 {strides = array<i32>} : memref<64x128xf32, #tpu.memory_space<vmem>>, vector<64x128xf32>,
    %c0_7 = arith.constant 0 : index
    %c0_8 = arith.constant 0 : index
    %7 = vector.load %arg2[%c0_7, %c0_8] : memref<32x128xf32, #tpu.memory_space<vmem>>, vector<32x128xf32>
    %cst_9 = arith.constant 0.000000e+00 : f32
    %8 = vector.broadcast %cst_9 : f32 to vector<8x32xf32>
    %c0_i32 = arith.constant 0 : i32
    %c8_i32 = arith.constant 8 : i32
    %9 = arith.muli %c0_i32, %c8_i32 : i32
    %10 = tpu.assume_multiple %9, 8 : i32
    %11 = arith.index_cast %10 : i32 to index
    %c0_10 = arith.constant 0 : index
    %12 = vector.load %arg14[%11, %c0_10] : memref<64x128xf32, #tpu.memory_space<vmem>>, vector<8x128xf32>
    %cst_11 = arith.constant dense<0.000000e+00> : vector<8x128xf32>
    %13 = tpu.matmul %8, %7, %cst_11 {dimension_numbers = #tpu.dot_dimension_numbers<[1], [0], [0], [1], [0, 0, 1, 1], [], []>} : vector<8x32xf32>, vector<32x128xf32>, vector<8x128xf32> -> vector<8x128xf32>
    %14 = arith.addf %12, %13 : vector<8x128xf32>
    %15 = vector.extract_strided_slice %14 {offsets = [0, 0], sizes = [8, 32], strides = [1, 1]} : vector<8x128xf32> to vector<8x32xf32>
    %16 = arith.negf %15 : vector<8x32xf32>
    %17 = math.exp %16 : vector<8x32xf32>
    %cst_12 = arith.constant 1.000000e+00 : f32
    %18 = vector.broadcast %cst_12 : f32 to vector<8x32xf32>
    %19 = arith.addf %18, %17 : vector<8x32xf32>
    %20 = arith.divf %18, %19 : vector<8x32xf32>
    %21 = vector.extract_strided_slice %14 {offsets = [0, 32], sizes = [8, 32], strides = [1, 1]} : vector<8x128xf32> to vector<8x32xf32>
    %22 = arith.negf %21 : vector<8x32xf32>
    %23 = math.exp %22 : vector<8x32xf32>
    %cst_13 = arith.constant 1.000000e+00 : f32
    %24 = vector.broadcast %cst_13 : f32 to vector<8x32xf32>
    %25 = arith.addf %24, %23 : vector<8x32xf32>
    %26 = arith.divf %24, %25 : vector<8x32xf32>
    %27 = vector.extract_strided_slice %14 {offsets = [0, 64], sizes = [8, 32], strides = [1, 1]} : vector<8x128xf32> to vector<8x32xf32>
    %28 = math.tanh %27 : vector<8x32xf32>
    %29 = vector.extract_strided_slice %14 {offsets = [0, 96], sizes = [8, 32], strides = [1, 1]} : vector<8x128xf32> to vector<8x32xf32>
    %30 = arith.negf %29 : vector<8x32xf32>
    %31 = math.exp %30 : vector<8x32xf32>
    %cst_14 = arith.constant 1.000000e+00 : f32
    %32 = vector.broadcast %cst_14 : f32 to vector<8x32xf32>
    %33 = arith.addf %32, %31 : vector<8x32xf32>
    %34 = arith.divf %32, %33 : vector<8x32xf32>
    %35 = arith.mulf %26, %8 : vector<8x32xf32>
    %36 = arith.mulf %20, %28 : vector<8x32xf32>
    %37 = arith.addf %35, %36 : vector<8x32xf32>
    %38 = math.tanh %37 : vector<8x32xf32>
    %39 = arith.mulf %34, %38 : vector<8x32xf32>
    %40 = arith.index_cast %10 : i32 to index
    %c0_15 = arith.constant 0 : index
    %41 = vector.load %arg15[%40, %c0_15] : memref<64x32xf32, #tpu.memory_space<vmem>>, vector<8x32xf32>
    tpu.vector_store %arg15[%40, %c0_15], %39 {strides = array<i32>} : memref<64x32xf32, #tpu.memory_space<vmem>>, vector<8x32xf32>,
    %c1_i32 = arith.constant 1 : i32
    %c8_i32_16 = arith.constant 8 : i32
    %42 = arith.muli %c1_i32, %c8_i32_16 : i32
    %43 = tpu.assume_multiple %42, 8 : i32
    %44 = arith.index_cast %43 : i32 to index
    %c0_17 = arith.constant 0 : index
    %45 = vector.load %arg14[%44, %c0_17] : memref<64x128xf32, #tpu.memory_space<vmem>>, vector<8x128xf32>
    %cst_18 = arith.constant dense<0.000000e+00> : vector<8x128xf32>
    %46 = tpu.matmul %39, %7, %cst_18 {dimension_numbers = #tpu.dot_dimension_numbers<[1], [0], [0], [1], [0, 0, 1, 1], [], []>} : vector<8x32xf32>, vector<32x128xf32>, vector<8x128xf32> -> vector<8x128xf32>
    %47 = arith.addf %45, %46 : vector<8x128xf32>
    %48 = vector.extract_strided_slice %47 {offsets = [0, 0], sizes = [8, 32], strides = [1, 1]} : vector<8x128xf32> to vector<8x32xf32>
    %49 = arith.negf %48 : vector<8x32xf32>
    %50 = math.exp %49 : vector<8x32xf32>
    %cst_19 = arith.constant 1.000000e+00 : f32
    %51 = vector.broadcast %cst_19 : f32 to vector<8x32xf32>
    %52 = arith.addf %51, %50 : vector<8x32xf32>
    %53 = arith.divf %51, %52 : vector<8x32xf32>
    %54 = vector.extract_strided_slice %47 {offsets = [0, 32], sizes = [8, 32], strides = [1, 1]} : vector<8x128xf32> to vector<8x32xf32>
    %55 = arith.negf %54 : vector<8x32xf32>
    %56 = math.exp %55 : vector<8x32xf32>
    %cst_20 = arith.constant 1.000000e+00 : f32
    %57 = vector.broadcast %cst_20 : f32 to vector<8x32xf32>
    %58 = arith.addf %57, %56 : vector<8x32xf32>
    %59 = arith.divf %57, %58 : vector<8x32xf32>
    %60 = vector.extract_strided_slice %47 {offsets = [0, 64], sizes = [8, 32], strides = [1, 1]} : vector<8x128xf32> to vector<8x32xf32>
    %61 = math.tanh %60 : vector<8x32xf32>
    %62 = vector.extract_strided_slice %47 {offsets = [0, 96], sizes = [8, 32], strides = [1, 1]} : vector<8x128xf32> to vector<8x32xf32>
    %63 = arith.negf %62 : vector<8x32xf32>
    %64 = math.exp %63 : vector<8x32xf32>
    %cst_21 = arith.constant 1.000000e+00 : f32
    %65 = vector.broadcast %cst_21 : f32 to vector<8x32xf32>
    %66 = arith.addf %65, %64 : vector<8x32xf32>
    %67 = arith.divf %65, %66 : vector<8x32xf32>
    %68 = arith.mulf %59, %37 : vector<8x32xf32>
    %69 = arith.mulf %53, %61 : vector<8x32xf32>
    %70 = arith.addf %68, %69 : vector<8x32xf32>
    %71 = math.tanh %70 : vector<8x32xf32>
    %72 = arith.mulf %67, %71 : vector<8x32xf32>
    %73 = arith.index_cast %43 : i32 to index
    %c0_22 = arith.constant 0 : index
    %74 = vector.load %arg15[%73, %c0_22] : memref<64x32xf32, #tpu.memory_space<vmem>>, vector<8x32xf32>
    tpu.vector_store %arg15[%73, %c0_22], %72 {strides = array<i32>} : memref<64x32xf32, #tpu.memory_space<vmem>>, vector<8x32xf32>,
    %c2_i32 = arith.constant 2 : i32
    %c8_i32_23 = arith.constant 8 : i32
    %75 = arith.muli %c2_i32, %c8_i32_23 : i32
    %76 = tpu.assume_multiple %75, 8 : i32
    %77 = arith.index_cast %76 : i32 to index
    %c0_24 = arith.constant 0 : index
    %78 = vector.load %arg14[%77, %c0_24] : memref<64x128xf32, #tpu.memory_space<vmem>>, vector<8x128xf32>
    %cst_25 = arith.constant dense<0.000000e+00> : vector<8x128xf32>
    %79 = tpu.matmul %72, %7, %cst_25 {dimension_numbers = #tpu.dot_dimension_numbers<[1], [0], [0], [1], [0, 0, 1, 1], [], []>} : vector<8x32xf32>, vector<32x128xf32>, vector<8x128xf32> -> vector<8x128xf32>
    %80 = arith.addf %78, %79 : vector<8x128xf32>
    %81 = vector.extract_strided_slice %80 {offsets = [0, 0], sizes = [8, 32], strides = [1, 1]} : vector<8x128xf32> to vector<8x32xf32>
    %82 = arith.negf %81 : vector<8x32xf32>
    %83 = math.exp %82 : vector<8x32xf32>
    %cst_26 = arith.constant 1.000000e+00 : f32
    %84 = vector.broadcast %cst_26 : f32 to vector<8x32xf32>
    %85 = arith.addf %84, %83 : vector<8x32xf32>
    %86 = arith.divf %84, %85 : vector<8x32xf32>
    %87 = vector.extract_strided_slice %80 {offsets = [0, 32], sizes = [8, 32], strides = [1, 1]} : vector<8x128xf32> to vector<8x32xf32>
    %88 = arith.negf %87 : vector<8x32xf32>
    %89 = math.exp %88 : vector<8x32xf32>
    %cst_27 = arith.constant 1.000000e+00 : f32
    %90 = vector.broadcast %cst_27 : f32 to vector<8x32xf32>
    %91 = arith.addf %90, %89 : vector<8x32xf32>
    %92 = arith.divf %90, %91 : vector<8x32xf32>
    %93 = vector.extract_strided_slice %80 {offsets = [0, 64], sizes = [8, 32], strides = [1, 1]} : vector<8x128xf32> to vector<8x32xf32>
    %94 = math.tanh %93 : vector<8x32xf32>
    %95 = vector.extract_strided_slice %80 {offsets = [0, 96], sizes = [8, 32], strides = [1, 1]} : vector<8x128xf32> to vector<8x32xf32>
    %96 = arith.negf %95 : vector<8x32xf32>
    %97 = math.exp %96 : vector<8x32xf32>
    %cst_28 = arith.constant 1.000000e+00 : f32
    %98 = vector.broadcast %cst_28 : f32 to vector<8x32xf32>
    %99 = arith.addf %98, %97 : vector<8x32xf32>
    %100 = arith.divf %98, %99 : vector<8x32xf32>
    %101 = arith.mulf %92, %70 : vector<8x32xf32>
    %102 = arith.mulf %86, %94 : vector<8x32xf32>
    %103 = arith.addf %101, %102 : vector<8x32xf32>
    %104 = math.tanh %103 : vector<8x32xf32>
    %105 = arith.mulf %100, %104 : vector<8x32xf32>
    %106 = arith.index_cast %76 : i32 to index
    %c0_29 = arith.constant 0 : index
    %107 = vector.load %arg15[%106, %c0_29] : memref<64x32xf32, #tpu.memory_space<vmem>>, vector<8x32xf32>
    tpu.vector_store %arg15[%106, %c0_29], %105 {strides = array<i32>} : memref<64x32xf32, #tpu.memory_space<vmem>>, vector<8x32xf32>,
    %c3_i32 = arith.constant 3 : i32
    %c8_i32_30 = arith.constant 8 : i32
    %108 = arith.muli %c3_i32, %c8_i32_30 : i32
    %109 = tpu.assume_multiple %108, 8 : i32
    %110 = arith.index_cast %109 : i32 to index
    %c0_31 = arith.constant 0 : index
    %111 = vector.load %arg14[%110, %c0_31] : memref<64x128xf32, #tpu.memory_space<vmem>>, vector<8x128xf32>
    %cst_32 = arith.constant dense<0.000000e+00> : vector<8x128xf32>
    %112 = tpu.matmul %105, %7, %cst_32 {dimension_numbers = #tpu.dot_dimension_numbers<[1], [0], [0], [1], [0, 0, 1, 1], [], []>} : vector<8x32xf32>, vector<32x128xf32>, vector<8x128xf32> -> vector<8x128xf32>
    %113 = arith.addf %111, %112 : vector<8x128xf32>
    %114 = vector.extract_strided_slice %113 {offsets = [0, 0], sizes = [8, 32], strides = [1, 1]} : vector<8x128xf32> to vector<8x32xf32>
    %115 = arith.negf %114 : vector<8x32xf32>
    %116 = math.exp %115 : vector<8x32xf32>
    %cst_33 = arith.constant 1.000000e+00 : f32
    %117 = vector.broadcast %cst_33 : f32 to vector<8x32xf32>
    %118 = arith.addf %117, %116 : vector<8x32xf32>
    %119 = arith.divf %117, %118 : vector<8x32xf32>
    %120 = vector.extract_strided_slice %113 {offsets = [0, 32], sizes = [8, 32], strides = [1, 1]} : vector<8x128xf32> to vector<8x32xf32>
    %121 = arith.negf %120 : vector<8x32xf32>
    %122 = math.exp %121 : vector<8x32xf32>
    %cst_34 = arith.constant 1.000000e+00 : f32
    %123 = vector.broadcast %cst_34 : f32 to vector<8x32xf32>
    %124 = arith.addf %123, %122 : vector<8x32xf32>
    %125 = arith.divf %123, %124 : vector<8x32xf32>
    %126 = vector.extract_strided_slice %113 {offsets = [0, 64], sizes = [8, 32], strides = [1, 1]} : vector<8x128xf32> to vector<8x32xf32>
    %127 = math.tanh %126 : vector<8x32xf32>
    %128 = vector.extract_strided_slice %113 {offsets = [0, 96], sizes = [8, 32], strides = [1, 1]} : vector<8x128xf32> to vector<8x32xf32>
    %129 = arith.negf %128 : vector<8x32xf32>
    %130 = math.exp %129 : vector<8x32xf32>
    %cst_35 = arith.constant 1.000000e+00 : f32
    %131 = vector.broadcast %cst_35 : f32 to vector<8x32xf32>
    %132 = arith.addf %131, %130 : vector<8x32xf32>
    %133 = arith.divf %131, %132 : vector<8x32xf32>
    %134 = arith.mulf %125, %103 : vector<8x32xf32>
    %135 = arith.mulf %119, %127 : vector<8x32xf32>
    %136 = arith.addf %134, %135 : vector<8x32xf32>
    %137 = math.tanh %136 : vector<8x32xf32>
    %138 = arith.mulf %133, %137 : vector<8x32xf32>
    %139 = arith.index_cast %109 : i32 to index
    %c0_36 = arith.constant 0 : index
    %140 = vector.load %arg15[%139, %c0_36] : memref<64x32xf32, #tpu.memory_space<vmem>>, vector<8x32xf32>
    tpu.vector_store %arg15[%139, %c0_36], %138 {strides = array<i32>} : memref<64x32xf32, #tpu.memory_space<vmem>>, vector<8x32xf32>,
    %c4_i32 = arith.constant 4 : i32
    %c8_i32_37 = arith.constant 8 : i32
    %141 = arith.muli %c4_i32, %c8_i32_37 : i32
    %142 = tpu.assume_multiple %141, 8 : i32
    %143 = arith.index_cast %142 : i32 to index
    %c0_38 = arith.constant 0 : index
    %144 = vector.load %arg14[%143, %c0_38] : memref<64x128xf32, #tpu.memory_space<vmem>>, vector<8x128xf32>
    %cst_39 = arith.constant dense<0.000000e+00> : vector<8x128xf32>
    %145 = tpu.matmul %138, %7, %cst_39 {dimension_numbers = #tpu.dot_dimension_numbers<[1], [0], [0], [1], [0, 0, 1, 1], [], []>} : vector<8x32xf32>, vector<32x128xf32>, vector<8x128xf32> -> vector<8x128xf32>
    %146 = arith.addf %144, %145 : vector<8x128xf32>
    %147 = vector.extract_strided_slice %146 {offsets = [0, 0], sizes = [8, 32], strides = [1, 1]} : vector<8x128xf32> to vector<8x32xf32>
    %148 = arith.negf %147 : vector<8x32xf32>
    %149 = math.exp %148 : vector<8x32xf32>
    %cst_40 = arith.constant 1.000000e+00 : f32
    %150 = vector.broadcast %cst_40 : f32 to vector<8x32xf32>
    %151 = arith.addf %150, %149 : vector<8x32xf32>
    %152 = arith.divf %150, %151 : vector<8x32xf32>
    %153 = vector.extract_strided_slice %146 {offsets = [0, 32], sizes = [8, 32], strides = [1, 1]} : vector<8x128xf32> to vector<8x32xf32>
    %154 = arith.negf %153 : vector<8x32xf32>
    %155 = math.exp %154 : vector<8x32xf32>
    %cst_41 = arith.constant 1.000000e+00 : f32
    %156 = vector.broadcast %cst_41 : f32 to vector<8x32xf32>
    %157 = arith.addf %156, %155 : vector<8x32xf32>
    %158 = arith.divf %156, %157 : vector<8x32xf32>
    %159 = vector.extract_strided_slice %146 {offsets = [0, 64], sizes = [8, 32], strides = [1, 1]} : vector<8x128xf32> to vector<8x32xf32>
    %160 = math.tanh %159 : vector<8x32xf32>
    %161 = vector.extract_strided_slice %146 {offsets = [0, 96], sizes = [8, 32], strides = [1, 1]} : vector<8x128xf32> to vector<8x32xf32>
    %162 = arith.negf %161 : vector<8x32xf32>
    %163 = math.exp %162 : vector<8x32xf32>
    %cst_42 = arith.constant 1.000000e+00 : f32
    %164 = vector.broadcast %cst_42 : f32 to vector<8x32xf32>
    %165 = arith.addf %164, %163 : vector<8x32xf32>
    %166 = arith.divf %164, %165 : vector<8x32xf32>
    %167 = arith.mulf %158, %136 : vector<8x32xf32>
    %168 = arith.mulf %152, %160 : vector<8x32xf32>
    %169 = arith.addf %167, %168 : vector<8x32xf32>
    %170 = math.tanh %169 : vector<8x32xf32>
    %171 = arith.mulf %166, %170 : vector<8x32xf32>
    %172 = arith.index_cast %142 : i32 to index
    %c0_43 = arith.constant 0 : index
    %173 = vector.load %arg15[%172, %c0_43] : memref<64x32xf32, #tpu.memory_space<vmem>>, vector<8x32xf32>
    tpu.vector_store %arg15[%172, %c0_43], %171 {strides = array<i32>} : memref<64x32xf32, #tpu.memory_space<vmem>>, vector<8x32xf32>,
    %c5_i32 = arith.constant 5 : i32
    %c8_i32_44 = arith.constant 8 : i32
    %174 = arith.muli %c5_i32, %c8_i32_44 : i32
    %175 = tpu.assume_multiple %174, 8 : i32
    %176 = arith.index_cast %175 : i32 to index
    %c0_45 = arith.constant 0 : index
    %177 = vector.load %arg14[%176, %c0_45] : memref<64x128xf32, #tpu.memory_space<vmem>>, vector<8x128xf32>
    %cst_46 = arith.constant dense<0.000000e+00> : vector<8x128xf32>
    %178 = tpu.matmul %171, %7, %cst_46 {dimension_numbers = #tpu.dot_dimension_numbers<[1], [0], [0], [1], [0, 0, 1, 1], [], []>} : vector<8x32xf32>, vector<32x128xf32>, vector<8x128xf32> -> vector<8x128xf32>
    %179 = arith.addf %177, %178 : vector<8x128xf32>
    %180 = vector.extract_strided_slice %179 {offsets = [0, 0], sizes = [8, 32], strides = [1, 1]} : vector<8x128xf32> to vector<8x32xf32>
    %181 = arith.negf %180 : vector<8x32xf32>
    %182 = math.exp %181 : vector<8x32xf32>
    %cst_47 = arith.constant 1.000000e+00 : f32
    %183 = vector.broadcast %cst_47 : f32 to vector<8x32xf32>
    %184 = arith.addf %183, %182 : vector<8x32xf32>
    %185 = arith.divf %183, %184 : vector<8x32xf32>
    %186 = vector.extract_strided_slice %179 {offsets = [0, 32], sizes = [8, 32], strides = [1, 1]} : vector<8x128xf32> to vector<8x32xf32>
    %187 = arith.negf %186 : vector<8x32xf32>
    %188 = math.exp %187 : vector<8x32xf32>
    %cst_48 = arith.constant 1.000000e+00 : f32
    %189 = vector.broadcast %cst_48 : f32 to vector<8x32xf32>
    %190 = arith.addf %189, %188 : vector<8x32xf32>
    %191 = arith.divf %189, %190 : vector<8x32xf32>
    %192 = vector.extract_strided_slice %179 {offsets = [0, 64], sizes = [8, 32], strides = [1, 1]} : vector<8x128xf32> to vector<8x32xf32>
    %193 = math.tanh %192 : vector<8x32xf32>
    %194 = vector.extract_strided_slice %179 {offsets = [0, 96], sizes = [8, 32], strides = [1, 1]} : vector<8x128xf32> to vector<8x32xf32>
    %195 = arith.negf %194 : vector<8x32xf32>
    %196 = math.exp %195 : vector<8x32xf32>
    %cst_49 = arith.constant 1.000000e+00 : f32
    %197 = vector.broadcast %cst_49 : f32 to vector<8x32xf32>
    %198 = arith.addf %197, %196 : vector<8x32xf32>
    %199 = arith.divf %197, %198 : vector<8x32xf32>
    %200 = arith.mulf %191, %169 : vector<8x32xf32>
    %201 = arith.mulf %185, %193 : vector<8x32xf32>
    %202 = arith.addf %200, %201 : vector<8x32xf32>
    %203 = math.tanh %202 : vector<8x32xf32>
    %204 = arith.mulf %199, %203 : vector<8x32xf32>
    %205 = arith.index_cast %175 : i32 to index
    %c0_50 = arith.constant 0 : index
    %206 = vector.load %arg15[%205, %c0_50] : memref<64x32xf32, #tpu.memory_space<vmem>>, vector<8x32xf32>
    tpu.vector_store %arg15[%205, %c0_50], %204 {strides = array<i32>} : memref<64x32xf32, #tpu.memory_space<vmem>>, vector<8x32xf32>,
    %c6_i32 = arith.constant 6 : i32
    %c8_i32_51 = arith.constant 8 : i32
    %207 = arith.muli %c6_i32, %c8_i32_51 : i32
    %208 = tpu.assume_multiple %207, 8 : i32
    %209 = arith.index_cast %208 : i32 to index
    %c0_52 = arith.constant 0 : index
    %210 = vector.load %arg14[%209, %c0_52] : memref<64x128xf32, #tpu.memory_space<vmem>>, vector<8x128xf32>
    %cst_53 = arith.constant dense<0.000000e+00> : vector<8x128xf32>
    %211 = tpu.matmul %204, %7, %cst_53 {dimension_numbers = #tpu.dot_dimension_numbers<[1], [0], [0], [1], [0, 0, 1, 1], [], []>} : vector<8x32xf32>, vector<32x128xf32>, vector<8x128xf32> -> vector<8x128xf32>
    %212 = arith.addf %210, %211 : vector<8x128xf32>
    %213 = vector.extract_strided_slice %212 {offsets = [0, 0], sizes = [8, 32], strides = [1, 1]} : vector<8x128xf32> to vector<8x32xf32>
    %214 = arith.negf %213 : vector<8x32xf32>
    %215 = math.exp %214 : vector<8x32xf32>
    %cst_54 = arith.constant 1.000000e+00 : f32
    %216 = vector.broadcast %cst_54 : f32 to vector<8x32xf32>
    %217 = arith.addf %216, %215 : vector<8x32xf32>
    %218 = arith.divf %216, %217 : vector<8x32xf32>
    %219 = vector.extract_strided_slice %212 {offsets = [0, 32], sizes = [8, 32], strides = [1, 1]} : vector<8x128xf32> to vector<8x32xf32>
    %220 = arith.negf %219 : vector<8x32xf32>
    %221 = math.exp %220 : vector<8x32xf32>
    %cst_55 = arith.constant 1.000000e+00 : f32
    %222 = vector.broadcast %cst_55 : f32 to vector<8x32xf32>
    %223 = arith.addf %222, %221 : vector<8x32xf32>
    %224 = arith.divf %222, %223 : vector<8x32xf32>
    %225 = vector.extract_strided_slice %212 {offsets = [0, 64], sizes = [8, 32], strides = [1, 1]} : vector<8x128xf32> to vector<8x32xf32>
    %226 = math.tanh %225 : vector<8x32xf32>
    %227 = vector.extract_strided_slice %212 {offsets = [0, 96], sizes = [8, 32], strides = [1, 1]} : vector<8x128xf32> to vector<8x32xf32>
    %228 = arith.negf %227 : vector<8x32xf32>
    %229 = math.exp %228 : vector<8x32xf32>
    %cst_56 = arith.constant 1.000000e+00 : f32
    %230 = vector.broadcast %cst_56 : f32 to vector<8x32xf32>
    %231 = arith.addf %230, %229 : vector<8x32xf32>
    %232 = arith.divf %230, %231 : vector<8x32xf32>
    %233 = arith.mulf %224, %202 : vector<8x32xf32>
    %234 = arith.mulf %218, %226 : vector<8x32xf32>
    %235 = arith.addf %233, %234 : vector<8x32xf32>
    %236 = math.tanh %235 : vector<8x32xf32>
    %237 = arith.mulf %232, %236 : vector<8x32xf32>
    %238 = arith.index_cast %208 : i32 to index
    %c0_57 = arith.constant 0 : index
    %239 = vector.load %arg15[%238, %c0_57] : memref<64x32xf32, #tpu.memory_space<vmem>>, vector<8x32xf32>
    tpu.vector_store %arg15[%238, %c0_57], %237 {strides = array<i32>} : memref<64x32xf32, #tpu.memory_space<vmem>>, vector<8x32xf32>,
    %c7_i32 = arith.constant 7 : i32
    %c8_i32_58 = arith.constant 8 : i32
    %240 = arith.muli %c7_i32, %c8_i32_58 : i32
    %241 = tpu.assume_multiple %240, 8 : i32
    %242 = arith.index_cast %241 : i32 to index
    %c0_59 = arith.constant 0 : index
    %243 = vector.load %arg14[%242, %c0_59] : memref<64x128xf32, #tpu.memory_space<vmem>>, vector<8x128xf32>
    %cst_60 = arith.constant dense<0.000000e+00> : vector<8x128xf32>
    %244 = tpu.matmul %237, %7, %cst_60 {dimension_numbers = #tpu.dot_dimension_numbers<[1], [0], [0], [1], [0, 0, 1, 1], [], []>} : vector<8x32xf32>, vector<32x128xf32>, vector<8x128xf32> -> vector<8x128xf32>
    %245 = arith.addf %243, %244 : vector<8x128xf32>
    %246 = vector.extract_strided_slice %245 {offsets = [0, 0], sizes = [8, 32], strides = [1, 1]} : vector<8x128xf32> to vector<8x32xf32>
    %247 = arith.negf %246 : vector<8x32xf32>
    %248 = math.exp %247 : vector<8x32xf32>
    %cst_61 = arith.constant 1.000000e+00 : f32
    %249 = vector.broadcast %cst_61 : f32 to vector<8x32xf32>
    %250 = arith.addf %249, %248 : vector<8x32xf32>
    %251 = arith.divf %249, %250 : vector<8x32xf32>
    %252 = vector.extract_strided_slice %245 {offsets = [0, 32], sizes = [8, 32], strides = [1, 1]} : vector<8x128xf32> to vector<8x32xf32>
    %253 = arith.negf %252 : vector<8x32xf32>
    %254 = math.exp %253 : vector<8x32xf32>
    %cst_62 = arith.constant 1.000000e+00 : f32
    %255 = vector.broadcast %cst_62 : f32 to vector<8x32xf32>
    %256 = arith.addf %255, %254 : vector<8x32xf32>
    %257 = arith.divf %255, %256 : vector<8x32xf32>
    %258 = vector.extract_strided_slice %245 {offsets = [0, 64], sizes = [8, 32], strides = [1, 1]} : vector<8x128xf32> to vector<8x32xf32>
    %259 = math.tanh %258 : vector<8x32xf32>
    %260 = vector.extract_strided_slice %245 {offsets = [0, 96], sizes = [8, 32], strides = [1, 1]} : vector<8x128xf32> to vector<8x32xf32>
    %261 = arith.negf %260 : vector<8x32xf32>
    %262 = math.exp %261 : vector<8x32xf32>
    %cst_63 = arith.constant 1.000000e+00 : f32
    %263 = vector.broadcast %cst_63 : f32 to vector<8x32xf32>
    %264 = arith.addf %263, %262 : vector<8x32xf32>
    %265 = arith.divf %263, %264 : vector<8x32xf32>
    %266 = arith.mulf %257, %235 : vector<8x32xf32>
    %267 = arith.mulf %251, %259 : vector<8x32xf32>
    %268 = arith.addf %266, %267 : vector<8x32xf32>
    %269 = math.tanh %268 : vector<8x32xf32>
    %270 = arith.mulf %265, %269 : vector<8x32xf32>
    %271 = arith.index_cast %241 : i32 to index
    %c0_64 = arith.constant 0 : index
    %272 = vector.load %arg15[%271, %c0_64] : memref<64x32xf32, #tpu.memory_space<vmem>>, vector<8x32xf32>
    tpu.vector_store %arg15[%271, %c0_64], %270 {strides = array<i32>} : memref<64x32xf32, #tpu.memory_space<vmem>>, vector<8x32xf32>,
    %c8_i32_65 = arith.constant 8 : i32
    %c0_66 = arith.constant 0 : index
    %c0_67 = arith.constant 0 : index
    %273 = vector.load %arg15[%c0_66, %c0_67] : memref<64x32xf32, #tpu.memory_space<vmem>>, vector<64x32xf32>
    %c0_68 = arith.constant 0 : index
    %c0_69 = arith.constant 0 : index
    %274 = vector.load %arg4[%c0_68, %c0_69] : memref<32x128xf32, #tpu.memory_space<vmem>>, vector<32x128xf32>
    %cst_70 = arith.constant dense<0.000000e+00> : vector<64x128xf32>
    %275 = tpu.matmul %273, %274, %cst_70 {dimension_numbers = #tpu.dot_dimension_numbers<[1], [0], [0], [1], [0, 0, 1, 1], [], []>} : vector<64x32xf32>, vector<32x128xf32>, vector<64x128xf32> -> vector<64x128xf32>
    %c0_71 = arith.constant 0 : index
    %c0_72 = arith.constant 0 : index
    %276 = vector.load %arg6[%c0_71, %c0_72] : memref<1x128xf32, #tpu.memory_space<vmem>>, vector<1x128xf32>
    %277 = vector.broadcast %276 : vector<1x128xf32> to vector<64x128xf32>
    %278 = arith.addf %275, %277 : vector<64x128xf32>
    %c0_73 = arith.constant 0 : index
    %c0_74 = arith.constant 0 : index
    %279 = vector.load %arg14[%c0_73, %c0_74] : memref<64x128xf32, #tpu.memory_space<vmem>>, vector<64x128xf32>
    tpu.vector_store %arg14[%c0_73, %c0_74], %278 {strides = array<i32>} : memref<64x128xf32, #tpu.memory_space<vmem>>, vector<64x128xf32>,
    %c0_75 = arith.constant 0 : index
    %c0_76 = arith.constant 0 : index
    %280 = vector.load %arg5[%c0_75, %c0_76] : memref<32x128xf32, #tpu.memory_space<vmem>>, vector<32x128xf32>
    %cst_77 = arith.constant 0.000000e+00 : f32
    %281 = vector.broadcast %cst_77 : f32 to vector<8x32xf32>
    %c0_i32_78 = arith.constant 0 : i32
    %c8_i32_79 = arith.constant 8 : i32
    %282 = arith.muli %c0_i32_78, %c8_i32_79 : i32
    %283 = tpu.assume_multiple %282, 8 : i32
    %284 = arith.index_cast %283 : i32 to index
    %c0_80 = arith.constant 0 : index
    %285 = vector.load %arg14[%284, %c0_80] : memref<64x128xf32, #tpu.memory_space<vmem>>, vector<8x128xf32>
    %cst_81 = arith.constant dense<0.000000e+00> : vector<8x128xf32>
    %286 = tpu.matmul %281, %280, %cst_81 {dimension_numbers = #tpu.dot_dimension_numbers<[1], [0], [0], [1], [0, 0, 1, 1], [], []>} : vector<8x32xf32>, vector<32x128xf32>, vector<8x128xf32> -> vector<8x128xf32>
    %287 = arith.addf %285, %286 : vector<8x128xf32>
    %288 = vector.extract_strided_slice %287 {offsets = [0, 0], sizes = [8, 32], strides = [1, 1]} : vector<8x128xf32> to vector<8x32xf32>
    %289 = arith.negf %288 : vector<8x32xf32>
    %290 = math.exp %289 : vector<8x32xf32>
    %cst_82 = arith.constant 1.000000e+00 : f32
    %291 = vector.broadcast %cst_82 : f32 to vector<8x32xf32>
    %292 = arith.addf %291, %290 : vector<8x32xf32>
    %293 = arith.divf %291, %292 : vector<8x32xf32>
    %294 = vector.extract_strided_slice %287 {offsets = [0, 32], sizes = [8, 32], strides = [1, 1]} : vector<8x128xf32> to vector<8x32xf32>
    %295 = arith.negf %294 : vector<8x32xf32>
    %296 = math.exp %295 : vector<8x32xf32>
    %cst_83 = arith.constant 1.000000e+00 : f32
    %297 = vector.broadcast %cst_83 : f32 to vector<8x32xf32>
    %298 = arith.addf %297, %296 : vector<8x32xf32>
    %299 = arith.divf %297, %298 : vector<8x32xf32>
    %300 = vector.extract_strided_slice %287 {offsets = [0, 64], sizes = [8, 32], strides = [1, 1]} : vector<8x128xf32> to vector<8x32xf32>
    %301 = math.tanh %300 : vector<8x32xf32>
    %302 = vector.extract_strided_slice %287 {offsets = [0, 96], sizes = [8, 32], strides = [1, 1]} : vector<8x128xf32> to vector<8x32xf32>
    %303 = arith.negf %302 : vector<8x32xf32>
    %304 = math.exp %303 : vector<8x32xf32>
    %cst_84 = arith.constant 1.000000e+00 : f32
    %305 = vector.broadcast %cst_84 : f32 to vector<8x32xf32>
    %306 = arith.addf %305, %304 : vector<8x32xf32>
    %307 = arith.divf %305, %306 : vector<8x32xf32>
    %308 = arith.mulf %299, %281 : vector<8x32xf32>
    %309 = arith.mulf %293, %301 : vector<8x32xf32>
    %310 = arith.addf %308, %309 : vector<8x32xf32>
    %311 = math.tanh %310 : vector<8x32xf32>
    %312 = arith.mulf %307, %311 : vector<8x32xf32>
    %c1_i32_85 = arith.constant 1 : i32
    %c8_i32_86 = arith.constant 8 : i32
    %313 = arith.muli %c1_i32_85, %c8_i32_86 : i32
    %314 = tpu.assume_multiple %313, 8 : i32
    %315 = arith.index_cast %314 : i32 to index
    %c0_87 = arith.constant 0 : index
    %316 = vector.load %arg14[%315, %c0_87] : memref<64x128xf32, #tpu.memory_space<vmem>>, vector<8x128xf32>
    %cst_88 = arith.constant dense<0.000000e+00> : vector<8x128xf32>
    %317 = tpu.matmul %312, %280, %cst_88 {dimension_numbers = #tpu.dot_dimension_numbers<[1], [0], [0], [1], [0, 0, 1, 1], [], []>} : vector<8x32xf32>, vector<32x128xf32>, vector<8x128xf32> -> vector<8x128xf32>
    %318 = arith.addf %316, %317 : vector<8x128xf32>
    %319 = vector.extract_strided_slice %318 {offsets = [0, 0], sizes = [8, 32], strides = [1, 1]} : vector<8x128xf32> to vector<8x32xf32>
    %320 = arith.negf %319 : vector<8x32xf32>
    %321 = math.exp %320 : vector<8x32xf32>
    %cst_89 = arith.constant 1.000000e+00 : f32
    %322 = vector.broadcast %cst_89 : f32 to vector<8x32xf32>
    %323 = arith.addf %322, %321 : vector<8x32xf32>
    %324 = arith.divf %322, %323 : vector<8x32xf32>
    %325 = vector.extract_strided_slice %318 {offsets = [0, 32], sizes = [8, 32], strides = [1, 1]} : vector<8x128xf32> to vector<8x32xf32>
    %326 = arith.negf %325 : vector<8x32xf32>
    %327 = math.exp %326 : vector<8x32xf32>
    %cst_90 = arith.constant 1.000000e+00 : f32
    %328 = vector.broadcast %cst_90 : f32 to vector<8x32xf32>
    %329 = arith.addf %328, %327 : vector<8x32xf32>
    %330 = arith.divf %328, %329 : vector<8x32xf32>
    %331 = vector.extract_strided_slice %318 {offsets = [0, 64], sizes = [8, 32], strides = [1, 1]} : vector<8x128xf32> to vector<8x32xf32>
    %332 = math.tanh %331 : vector<8x32xf32>
    %333 = vector.extract_strided_slice %318 {offsets = [0, 96], sizes = [8, 32], strides = [1, 1]} : vector<8x128xf32> to vector<8x32xf32>
    %334 = arith.negf %333 : vector<8x32xf32>
    %335 = math.exp %334 : vector<8x32xf32>
    %cst_91 = arith.constant 1.000000e+00 : f32
    %336 = vector.broadcast %cst_91 : f32 to vector<8x32xf32>
    %337 = arith.addf %336, %335 : vector<8x32xf32>
    %338 = arith.divf %336, %337 : vector<8x32xf32>
    %339 = arith.mulf %330, %310 : vector<8x32xf32>
    %340 = arith.mulf %324, %332 : vector<8x32xf32>
    %341 = arith.addf %339, %340 : vector<8x32xf32>
    %342 = math.tanh %341 : vector<8x32xf32>
    %343 = arith.mulf %338, %342 : vector<8x32xf32>
    %c2_i32_92 = arith.constant 2 : i32
    %c8_i32_93 = arith.constant 8 : i32
    %344 = arith.muli %c2_i32_92, %c8_i32_93 : i32
    %345 = tpu.assume_multiple %344, 8 : i32
    %346 = arith.index_cast %345 : i32 to index
    %c0_94 = arith.constant 0 : index
    %347 = vector.load %arg14[%346, %c0_94] : memref<64x128xf32, #tpu.memory_space<vmem>>, vector<8x128xf32>
    %cst_95 = arith.constant dense<0.000000e+00> : vector<8x128xf32>
    %348 = tpu.matmul %343, %280, %cst_95 {dimension_numbers = #tpu.dot_dimension_numbers<[1], [0], [0], [1], [0, 0, 1, 1], [], []>} : vector<8x32xf32>, vector<32x128xf32>, vector<8x128xf32> -> vector<8x128xf32>
    %349 = arith.addf %347, %348 : vector<8x128xf32>
    %350 = vector.extract_strided_slice %349 {offsets = [0, 0], sizes = [8, 32], strides = [1, 1]} : vector<8x128xf32> to vector<8x32xf32>
    %351 = arith.negf %350 : vector<8x32xf32>
    %352 = math.exp %351 : vector<8x32xf32>
    %cst_96 = arith.constant 1.000000e+00 : f32
    %353 = vector.broadcast %cst_96 : f32 to vector<8x32xf32>
    %354 = arith.addf %353, %352 : vector<8x32xf32>
    %355 = arith.divf %353, %354 : vector<8x32xf32>
    %356 = vector.extract_strided_slice %349 {offsets = [0, 32], sizes = [8, 32], strides = [1, 1]} : vector<8x128xf32> to vector<8x32xf32>
    %357 = arith.negf %356 : vector<8x32xf32>
    %358 = math.exp %357 : vector<8x32xf32>
    %cst_97 = arith.constant 1.000000e+00 : f32
    %359 = vector.broadcast %cst_97 : f32 to vector<8x32xf32>
    %360 = arith.addf %359, %358 : vector<8x32xf32>
    %361 = arith.divf %359, %360 : vector<8x32xf32>
    %362 = vector.extract_strided_slice %349 {offsets = [0, 64], sizes = [8, 32], strides = [1, 1]} : vector<8x128xf32> to vector<8x32xf32>
    %363 = math.tanh %362 : vector<8x32xf32>
    %364 = vector.extract_strided_slice %349 {offsets = [0, 96], sizes = [8, 32], strides = [1, 1]} : vector<8x128xf32> to vector<8x32xf32>
    %365 = arith.negf %364 : vector<8x32xf32>
    %366 = math.exp %365 : vector<8x32xf32>
    %cst_98 = arith.constant 1.000000e+00 : f32
    %367 = vector.broadcast %cst_98 : f32 to vector<8x32xf32>
    %368 = arith.addf %367, %366 : vector<8x32xf32>
    %369 = arith.divf %367, %368 : vector<8x32xf32>
    %370 = arith.mulf %361, %341 : vector<8x32xf32>
    %371 = arith.mulf %355, %363 : vector<8x32xf32>
    %372 = arith.addf %370, %371 : vector<8x32xf32>
    %373 = math.tanh %372 : vector<8x32xf32>
    %374 = arith.mulf %369, %373 : vector<8x32xf32>
    %c3_i32_99 = arith.constant 3 : i32
    %c8_i32_100 = arith.constant 8 : i32
    %375 = arith.muli %c3_i32_99, %c8_i32_100 : i32
    %376 = tpu.assume_multiple %375, 8 : i32
    %377 = arith.index_cast %376 : i32 to index
    %c0_101 = arith.constant 0 : index
    %378 = vector.load %arg14[%377, %c0_101] : memref<64x128xf32, #tpu.memory_space<vmem>>, vector<8x128xf32>
    %cst_102 = arith.constant dense<0.000000e+00> : vector<8x128xf32>
    %379 = tpu.matmul %374, %280, %cst_102 {dimension_numbers = #tpu.dot_dimension_numbers<[1], [0], [0], [1], [0, 0, 1, 1], [], []>} : vector<8x32xf32>, vector<32x128xf32>, vector<8x128xf32> -> vector<8x128xf32>
    %380 = arith.addf %378, %379 : vector<8x128xf32>
    %381 = vector.extract_strided_slice %380 {offsets = [0, 0], sizes = [8, 32], strides = [1, 1]} : vector<8x128xf32> to vector<8x32xf32>
    %382 = arith.negf %381 : vector<8x32xf32>
    %383 = math.exp %382 : vector<8x32xf32>
    %cst_103 = arith.constant 1.000000e+00 : f32
    %384 = vector.broadcast %cst_103 : f32 to vector<8x32xf32>
    %385 = arith.addf %384, %383 : vector<8x32xf32>
    %386 = arith.divf %384, %385 : vector<8x32xf32>
    %387 = vector.extract_strided_slice %380 {offsets = [0, 32], sizes = [8, 32], strides = [1, 1]} : vector<8x128xf32> to vector<8x32xf32>
    %388 = arith.negf %387 : vector<8x32xf32>
    %389 = math.exp %388 : vector<8x32xf32>
    %cst_104 = arith.constant 1.000000e+00 : f32
    %390 = vector.broadcast %cst_104 : f32 to vector<8x32xf32>
    %391 = arith.addf %390, %389 : vector<8x32xf32>
    %392 = arith.divf %390, %391 : vector<8x32xf32>
    %393 = vector.extract_strided_slice %380 {offsets = [0, 64], sizes = [8, 32], strides = [1, 1]} : vector<8x128xf32> to vector<8x32xf32>
    %394 = math.tanh %393 : vector<8x32xf32>
    %395 = vector.extract_strided_slice %380 {offsets = [0, 96], sizes = [8, 32], strides = [1, 1]} : vector<8x128xf32> to vector<8x32xf32>
    %396 = arith.negf %395 : vector<8x32xf32>
    %397 = math.exp %396 : vector<8x32xf32>
    %cst_105 = arith.constant 1.000000e+00 : f32
    %398 = vector.broadcast %cst_105 : f32 to vector<8x32xf32>
    %399 = arith.addf %398, %397 : vector<8x32xf32>
    %400 = arith.divf %398, %399 : vector<8x32xf32>
    %401 = arith.mulf %392, %372 : vector<8x32xf32>
    %402 = arith.mulf %386, %394 : vector<8x32xf32>
    %403 = arith.addf %401, %402 : vector<8x32xf32>
    %404 = math.tanh %403 : vector<8x32xf32>
    %405 = arith.mulf %400, %404 : vector<8x32xf32>
    %c4_i32_106 = arith.constant 4 : i32
    %c8_i32_107 = arith.constant 8 : i32
    %406 = arith.muli %c4_i32_106, %c8_i32_107 : i32
    %407 = tpu.assume_multiple %406, 8 : i32
    %408 = arith.index_cast %407 : i32 to index
    %c0_108 = arith.constant 0 : index
    %409 = vector.load %arg14[%408, %c0_108] : memref<64x128xf32, #tpu.memory_space<vmem>>, vector<8x128xf32>
    %cst_109 = arith.constant dense<0.000000e+00> : vector<8x128xf32>
    %410 = tpu.matmul %405, %280, %cst_109 {dimension_numbers = #tpu.dot_dimension_numbers<[1], [0], [0], [1], [0, 0, 1, 1], [], []>} : vector<8x32xf32>, vector<32x128xf32>, vector<8x128xf32> -> vector<8x128xf32>
    %411 = arith.addf %409, %410 : vector<8x128xf32>
    %412 = vector.extract_strided_slice %411 {offsets = [0, 0], sizes = [8, 32], strides = [1, 1]} : vector<8x128xf32> to vector<8x32xf32>
    %413 = arith.negf %412 : vector<8x32xf32>
    %414 = math.exp %413 : vector<8x32xf32>
    %cst_110 = arith.constant 1.000000e+00 : f32
    %415 = vector.broadcast %cst_110 : f32 to vector<8x32xf32>
    %416 = arith.addf %415, %414 : vector<8x32xf32>
    %417 = arith.divf %415, %416 : vector<8x32xf32>
    %418 = vector.extract_strided_slice %411 {offsets = [0, 32], sizes = [8, 32], strides = [1, 1]} : vector<8x128xf32> to vector<8x32xf32>
    %419 = arith.negf %418 : vector<8x32xf32>
    %420 = math.exp %419 : vector<8x32xf32>
    %cst_111 = arith.constant 1.000000e+00 : f32
    %421 = vector.broadcast %cst_111 : f32 to vector<8x32xf32>
    %422 = arith.addf %421, %420 : vector<8x32xf32>
    %423 = arith.divf %421, %422 : vector<8x32xf32>
    %424 = vector.extract_strided_slice %411 {offsets = [0, 64], sizes = [8, 32], strides = [1, 1]} : vector<8x128xf32> to vector<8x32xf32>
    %425 = math.tanh %424 : vector<8x32xf32>
    %426 = vector.extract_strided_slice %411 {offsets = [0, 96], sizes = [8, 32], strides = [1, 1]} : vector<8x128xf32> to vector<8x32xf32>
    %427 = arith.negf %426 : vector<8x32xf32>
    %428 = math.exp %427 : vector<8x32xf32>
    %cst_112 = arith.constant 1.000000e+00 : f32
    %429 = vector.broadcast %cst_112 : f32 to vector<8x32xf32>
    %430 = arith.addf %429, %428 : vector<8x32xf32>
    %431 = arith.divf %429, %430 : vector<8x32xf32>
    %432 = arith.mulf %423, %403 : vector<8x32xf32>
    %433 = arith.mulf %417, %425 : vector<8x32xf32>
    %434 = arith.addf %432, %433 : vector<8x32xf32>
    %435 = math.tanh %434 : vector<8x32xf32>
    %436 = arith.mulf %431, %435 : vector<8x32xf32>
    %c5_i32_113 = arith.constant 5 : i32
    %c8_i32_114 = arith.constant 8 : i32
    %437 = arith.muli %c5_i32_113, %c8_i32_114 : i32
    %438 = tpu.assume_multiple %437, 8 : i32
    %439 = arith.index_cast %438 : i32 to index
    %c0_115 = arith.constant 0 : index
    %440 = vector.load %arg14[%439, %c0_115] : memref<64x128xf32, #tpu.memory_space<vmem>>, vector<8x128xf32>
    %cst_116 = arith.constant dense<0.000000e+00> : vector<8x128xf32>
    %441 = tpu.matmul %436, %280, %cst_116 {dimension_numbers = #tpu.dot_dimension_numbers<[1], [0], [0], [1], [0, 0, 1, 1], [], []>} : vector<8x32xf32>, vector<32x128xf32>, vector<8x128xf32> -> vector<8x128xf32>
    %442 = arith.addf %440, %441 : vector<8x128xf32>
    %443 = vector.extract_strided_slice %442 {offsets = [0, 0], sizes = [8, 32], strides = [1, 1]} : vector<8x128xf32> to vector<8x32xf32>
    %444 = arith.negf %443 : vector<8x32xf32>
    %445 = math.exp %444 : vector<8x32xf32>
    %cst_117 = arith.constant 1.000000e+00 : f32
    %446 = vector.broadcast %cst_117 : f32 to vector<8x32xf32>
    %447 = arith.addf %446, %445 : vector<8x32xf32>
    %448 = arith.divf %446, %447 : vector<8x32xf32>
    %449 = vector.extract_strided_slice %442 {offsets = [0, 32], sizes = [8, 32], strides = [1, 1]} : vector<8x128xf32> to vector<8x32xf32>
    %450 = arith.negf %449 : vector<8x32xf32>
    %451 = math.exp %450 : vector<8x32xf32>
    %cst_118 = arith.constant 1.000000e+00 : f32
    %452 = vector.broadcast %cst_118 : f32 to vector<8x32xf32>
    %453 = arith.addf %452, %451 : vector<8x32xf32>
    %454 = arith.divf %452, %453 : vector<8x32xf32>
    %455 = vector.extract_strided_slice %442 {offsets = [0, 64], sizes = [8, 32], strides = [1, 1]} : vector<8x128xf32> to vector<8x32xf32>
    %456 = math.tanh %455 : vector<8x32xf32>
    %457 = vector.extract_strided_slice %442 {offsets = [0, 96], sizes = [8, 32], strides = [1, 1]} : vector<8x128xf32> to vector<8x32xf32>
    %458 = arith.negf %457 : vector<8x32xf32>
    %459 = math.exp %458 : vector<8x32xf32>
    %cst_119 = arith.constant 1.000000e+00 : f32
    %460 = vector.broadcast %cst_119 : f32 to vector<8x32xf32>
    %461 = arith.addf %460, %459 : vector<8x32xf32>
    %462 = arith.divf %460, %461 : vector<8x32xf32>
    %463 = arith.mulf %454, %434 : vector<8x32xf32>
    %464 = arith.mulf %448, %456 : vector<8x32xf32>
    %465 = arith.addf %463, %464 : vector<8x32xf32>
    %466 = math.tanh %465 : vector<8x32xf32>
    %467 = arith.mulf %462, %466 : vector<8x32xf32>
    %c6_i32_120 = arith.constant 6 : i32
    %c8_i32_121 = arith.constant 8 : i32
    %468 = arith.muli %c6_i32_120, %c8_i32_121 : i32
    %469 = tpu.assume_multiple %468, 8 : i32
    %470 = arith.index_cast %469 : i32 to index
    %c0_122 = arith.constant 0 : index
    %471 = vector.load %arg14[%470, %c0_122] : memref<64x128xf32, #tpu.memory_space<vmem>>, vector<8x128xf32>
    %cst_123 = arith.constant dense<0.000000e+00> : vector<8x128xf32>
    %472 = tpu.matmul %467, %280, %cst_123 {dimension_numbers = #tpu.dot_dimension_numbers<[1], [0], [0], [1], [0, 0, 1, 1], [], []>} : vector<8x32xf32>, vector<32x128xf32>, vector<8x128xf32> -> vector<8x128xf32>
    %473 = arith.addf %471, %472 : vector<8x128xf32>
    %474 = vector.extract_strided_slice %473 {offsets = [0, 0], sizes = [8, 32], strides = [1, 1]} : vector<8x128xf32> to vector<8x32xf32>
    %475 = arith.negf %474 : vector<8x32xf32>
    %476 = math.exp %475 : vector<8x32xf32>
    %cst_124 = arith.constant 1.000000e+00 : f32
    %477 = vector.broadcast %cst_124 : f32 to vector<8x32xf32>
    %478 = arith.addf %477, %476 : vector<8x32xf32>
    %479 = arith.divf %477, %478 : vector<8x32xf32>
    %480 = vector.extract_strided_slice %473 {offsets = [0, 32], sizes = [8, 32], strides = [1, 1]} : vector<8x128xf32> to vector<8x32xf32>
    %481 = arith.negf %480 : vector<8x32xf32>
    %482 = math.exp %481 : vector<8x32xf32>
    %cst_125 = arith.constant 1.000000e+00 : f32
    %483 = vector.broadcast %cst_125 : f32 to vector<8x32xf32>
    %484 = arith.addf %483, %482 : vector<8x32xf32>
    %485 = arith.divf %483, %484 : vector<8x32xf32>
    %486 = vector.extract_strided_slice %473 {offsets = [0, 64], sizes = [8, 32], strides = [1, 1]} : vector<8x128xf32> to vector<8x32xf32>
    %487 = math.tanh %486 : vector<8x32xf32>
    %488 = vector.extract_strided_slice %473 {offsets = [0, 96], sizes = [8, 32], strides = [1, 1]} : vector<8x128xf32> to vector<8x32xf32>
    %489 = arith.negf %488 : vector<8x32xf32>
    %490 = math.exp %489 : vector<8x32xf32>
    %cst_126 = arith.constant 1.000000e+00 : f32
    %491 = vector.broadcast %cst_126 : f32 to vector<8x32xf32>
    %492 = arith.addf %491, %490 : vector<8x32xf32>
    %493 = arith.divf %491, %492 : vector<8x32xf32>
    %494 = arith.mulf %485, %465 : vector<8x32xf32>
    %495 = arith.mulf %479, %487 : vector<8x32xf32>
    %496 = arith.addf %494, %495 : vector<8x32xf32>
    %497 = math.tanh %496 : vector<8x32xf32>
    %498 = arith.mulf %493, %497 : vector<8x32xf32>
    %c7_i32_127 = arith.constant 7 : i32
    %c8_i32_128 = arith.constant 8 : i32
    %499 = arith.muli %c7_i32_127, %c8_i32_128 : i32
    %500 = tpu.assume_multiple %499, 8 : i32
    %501 = arith.index_cast %500 : i32 to index
    %c0_129 = arith.constant 0 : index
    %502 = vector.load %arg14[%501, %c0_129] : memref<64x128xf32, #tpu.memory_space<vmem>>, vector<8x128xf32>
    %cst_130 = arith.constant dense<0.000000e+00> : vector<8x128xf32>
    %503 = tpu.matmul %498, %280, %cst_130 {dimension_numbers = #tpu.dot_dimension_numbers<[1], [0], [0], [1], [0, 0, 1, 1], [], []>} : vector<8x32xf32>, vector<32x128xf32>, vector<8x128xf32> -> vector<8x128xf32>
    %504 = arith.addf %502, %503 : vector<8x128xf32>
    %505 = vector.extract_strided_slice %504 {offsets = [0, 0], sizes = [8, 32], strides = [1, 1]} : vector<8x128xf32> to vector<8x32xf32>
    %506 = arith.negf %505 : vector<8x32xf32>
    %507 = math.exp %506 : vector<8x32xf32>
    %cst_131 = arith.constant 1.000000e+00 : f32
    %508 = vector.broadcast %cst_131 : f32 to vector<8x32xf32>
    %509 = arith.addf %508, %507 : vector<8x32xf32>
    %510 = arith.divf %508, %509 : vector<8x32xf32>
    %511 = vector.extract_strided_slice %504 {offsets = [0, 32], sizes = [8, 32], strides = [1, 1]} : vector<8x128xf32> to vector<8x32xf32>
    %512 = arith.negf %511 : vector<8x32xf32>
    %513 = math.exp %512 : vector<8x32xf32>
    %cst_132 = arith.constant 1.000000e+00 : f32
    %514 = vector.broadcast %cst_132 : f32 to vector<8x32xf32>
    %515 = arith.addf %514, %513 : vector<8x32xf32>
    %516 = arith.divf %514, %515 : vector<8x32xf32>
    %517 = vector.extract_strided_slice %504 {offsets = [0, 64], sizes = [8, 32], strides = [1, 1]} : vector<8x128xf32> to vector<8x32xf32>
    %518 = math.tanh %517 : vector<8x32xf32>
    %519 = vector.extract_strided_slice %504 {offsets = [0, 96], sizes = [8, 32], strides = [1, 1]} : vector<8x128xf32> to vector<8x32xf32>
    %520 = arith.negf %519 : vector<8x32xf32>
    %521 = math.exp %520 : vector<8x32xf32>
    %cst_133 = arith.constant 1.000000e+00 : f32
    %522 = vector.broadcast %cst_133 : f32 to vector<8x32xf32>
    %523 = arith.addf %522, %521 : vector<8x32xf32>
    %524 = arith.divf %522, %523 : vector<8x32xf32>
    %525 = arith.mulf %516, %496 : vector<8x32xf32>
    %526 = arith.mulf %510, %518 : vector<8x32xf32>
    %527 = arith.addf %525, %526 : vector<8x32xf32>
    %528 = math.tanh %527 : vector<8x32xf32>
    %529 = arith.mulf %524, %528 : vector<8x32xf32>
    %c8_i32_134 = arith.constant 8 : i32
    %c0_135 = arith.constant 0 : index
    %c0_136 = arith.constant 0 : index
    %530 = vector.load %arg10[%c0_135, %c0_136] : memref<1x32xf32, #tpu.memory_space<vmem>>, vector<1x32xf32>
    %cst_137 = arith.constant 9.99999974E-6 : f32
    %531 = vector.broadcast %cst_137 : f32 to vector<1x32xf32>
    %532 = arith.addf %530, %531 : vector<1x32xf32>
    %533 = math.rsqrt %532 : vector<1x32xf32>
    %c0_138 = arith.constant 0 : index
    %c0_139 = arith.constant 0 : index
    %534 = vector.load %arg9[%c0_138, %c0_139] : memref<1x32xf32, #tpu.memory_space<vmem>>, vector<1x32xf32>
    %535 = vector.broadcast %534 : vector<1x32xf32> to vector<8x32xf32>
    %536 = arith.subf %529, %535 : vector<8x32xf32>
    %537 = vector.broadcast %533 : vector<1x32xf32> to vector<8x32xf32>
    %538 = arith.mulf %536, %537 : vector<8x32xf32>
    %c0_140 = arith.constant 0 : index
    %c0_141 = arith.constant 0 : index
    %539 = vector.load %arg7[%c0_140, %c0_141] : memref<1x32xf32, #tpu.memory_space<vmem>>, vector<1x32xf32>
    %540 = vector.broadcast %539 : vector<1x32xf32> to vector<8x32xf32>
    %541 = arith.mulf %538, %540 : vector<8x32xf32>
    %c0_142 = arith.constant 0 : index
    %c0_143 = arith.constant 0 : index
    %542 = vector.load %arg8[%c0_142, %c0_143] : memref<1x32xf32, #tpu.memory_space<vmem>>, vector<1x32xf32>
    %543 = vector.broadcast %542 : vector<1x32xf32> to vector<8x32xf32>
    %544 = arith.addf %541, %543 : vector<8x32xf32>
    %c0_144 = arith.constant 0 : index
    %c0_145 = arith.constant 0 : index
    %545 = vector.load %arg11[%c0_144, %c0_145] : memref<32x4xf32, #tpu.memory_space<vmem>>, vector<32x4xf32>
    %cst_146 = arith.constant dense<0.000000e+00> : vector<8x4xf32>
    %546 = tpu.matmul %544, %545, %cst_146 {dimension_numbers = #tpu.dot_dimension_numbers<[1], [0], [0], [1], [0, 0, 1, 1], [], []>} : vector<8x32xf32>, vector<32x4xf32>, vector<8x4xf32> -> vector<8x4xf32>
    %c0_147 = arith.constant 0 : index
    %c0_148 = arith.constant 0 : index
    %547 = vector.load %arg12[%c0_147, %c0_148] : memref<1x4xf32, #tpu.memory_space<vmem>>, vector<1x4xf32>
    %548 = vector.broadcast %547 : vector<1x4xf32> to vector<8x4xf32>
    %549 = arith.addf %546, %548 : vector<8x4xf32>
    %c0_149 = arith.constant 0 : index
    %c0_150 = arith.constant 0 : index
    %550 = vector.load %arg13[%c0_149, %c0_150] : memref<8x4xf32, #tpu.memory_space<vmem>>, vector<8x4xf32>
    tpu.vector_store %arg13[%c0_149, %c0_150], %549 {strides = array<i32>} : memref<8x4xf32, #tpu.memory_space<vmem>>, vector<8x4xf32>,
    return
  }
}

</mosaic_0001>

<llo_original>
// kernel: lstm_model_forward.1
$region0: #{lstm_model_forward.1}
  #allocation0 [shape = 'u32[]', space=smem, size = 0x4, offset = 0x4, fixed_abs, tag = 'smem constant byte address 0x4 - core index']
  #allocation1 [shape = 'u32[144,128]{1,0:T(1,128)}', space=vmem, size = 0x12000, scoped, tag = 'internal scratch']
  #allocation2 [shape = 'f32[64,128]{1,0:T(8,128)}', space=vmem, size = 0x8000, scoped, tag = 'scratch operand']
  #allocation3 [shape = 'f32[64,32]{1,0:T(8,128)}', space=vmem, size = 0x8000, scoped, tag = 'scratch operand']
  %s0 = inlined_call_operand.vmem [shape: f32[64,16], index: 0, kind: input, shape index: {}]
  %s1 = inlined_call_operand.vmem [shape: f32[16,128], index: 1, kind: input, shape index: {}]
  %s2 = inlined_call_operand.vmem [shape: f32[32,128], index: 2, kind: input, shape index: {}]
  %s3 = inlined_call_operand.vmem [shape: f32[1,128], index: 3, kind: input, shape index: {}]
  %s4 = inlined_call_operand.vmem [shape: f32[32,128], index: 4, kind: input, shape index: {}]
  %s5 = inlined_call_operand.vmem [shape: f32[32,128], index: 5, kind: input, shape index: {}]
  %s6 = inlined_call_operand.vmem [shape: f32[1,128], index: 6, kind: input, shape index: {}]
  %s7 = inlined_call_operand.vmem [shape: f32[1,32], index: 7, kind: input, shape index: {}]
  %s8 = inlined_call_operand.vmem [shape: f32[1,32], index: 8, kind: input, shape index: {}]
  %s9 = inlined_call_operand.vmem [shape: f32[1,32], index: 9, kind: input, shape index: {}]
  %s10 = inlined_call_operand.vmem [shape: f32[1,32], index: 10, kind: input, shape index: {}]
  %s11 = inlined_call_operand.vmem [shape: f32[32,4], index: 11, kind: input, shape index: {}]
  %s12 = inlined_call_operand.vmem [shape: f32[1,4], index: 12, kind: input, shape index: {}]
  %s13 = inlined_call_operand.vmem [shape: f32[8,4], index: 13, kind: output, shape index: {}]
  %s14 = sld [smem:[#allocation0]]
  $region62: #{lstm_model_forward.1} parent=0
    _
  %s16 = ssub.s32 1, %s14
  %s17 = scalar_select 0, %s16, %s14
  // Predicated region
  $region2: #{lstm_model_forward.1} parent=0 // pred_check
    _
  $region3: #{lstm_model_forward.1} parent=0 // pred_check_branch
    %19 = sbr.rel (0) target = $region5
  $region4: #{lstm_model_forward.1} parent=0 // pred_region
    _
  $region5: #{lstm_model_forward.1} parent=0 // pred_fallthru
    _
  // Predicated region
  $region6: #{lstm_model_forward.1} parent=0 // pred_check
    _
  $region7: #{lstm_model_forward.1} parent=0 // pred_check_branch
    %21 = sbr.rel (0) target = $region9
  $region8: #{lstm_model_forward.1} parent=0 // pred_region
    _
  $region9: #{lstm_model_forward.1} parent=0 // pred_fallthru
    _
  // Predicated region
  $region10: #{lstm_model_forward.1} parent=0 // pred_check
    _
  $region11: #{lstm_model_forward.1} parent=0 // pred_check_branch
    %23 = sbr.rel (0) target = $region13
  $region12: #{lstm_model_forward.1} parent=0 // pred_region
    _
  $region13: #{lstm_model_forward.1} parent=0 // pred_fallthru
    _
  // Predicated region
  $region14: #{lstm_model_forward.1} parent=0 // pred_check
    _
  $region15: #{lstm_model_forward.1} parent=0 // pred_check_branch
    %25 = sbr.rel (0) target = $region17
  $region16: #{lstm_model_forward.1} parent=0 // pred_region
    _
  $region17: #{lstm_model_forward.1} parent=0 // pred_fallthru
    _
  // Predicated region
  $region18: #{lstm_model_forward.1} parent=0 // pred_check
    _
  $region19: #{lstm_model_forward.1} parent=0 // pred_check_branch
    %27 = sbr.rel (0) target = $region21
  $region20: #{lstm_model_forward.1} parent=0 // pred_region
    _
  $region21: #{lstm_model_forward.1} parent=0 // pred_fallthru
    _
  // Predicated region
  $region22: #{lstm_model_forward.1} parent=0 // pred_check
    _
  $region23: #{lstm_model_forward.1} parent=0 // pred_check_branch
    %29 = sbr.rel (0) target = $region25
  $region24: #{lstm_model_forward.1} parent=0 // pred_region
    _
  $region25: #{lstm_model_forward.1} parent=0 // pred_fallthru
    _
  // Predicated region
  $region26: #{lstm_model_forward.1} parent=0 // pred_check
    _
  $region27: #{lstm_model_forward.1} parent=0 // pred_check_branch
    %31 = sbr.rel (0) target = $region29
  $region28: #{lstm_model_forward.1} parent=0 // pred_region
    _
  $region29: #{lstm_model_forward.1} parent=0 // pred_fallthru
    _
  // Predicated region
  $region30: #{lstm_model_forward.1} parent=0 // pred_check
    _
  $region31: #{lstm_model_forward.1} parent=0 // pred_check_branch
    %33 = sbr.rel (0) target = $region33
  $region32: #{lstm_model_forward.1} parent=0 // pred_region
    _
  $region33: #{lstm_model_forward.1} parent=0 // pred_fallthru
    _
  // Predicated region
  $region34: #{lstm_model_forward.1} parent=0 // pred_check
    _
  $region35: #{lstm_model_forward.1} parent=0 // pred_check_branch
    %35 = sbr.rel (0) target = $region37
  $region36: #{lstm_model_forward.1} parent=0 // pred_region
    _
  $region37: #{lstm_model_forward.1} parent=0 // pred_fallthru
    _
  // Predicated region
  $region38: #{lstm_model_forward.1} parent=0 // pred_check
    _
  $region39: #{lstm_model_forward.1} parent=0 // pred_check_branch
    %37 = sbr.rel (0) target = $region41
  $region40: #{lstm_model_forward.1} parent=0 // pred_region
    _
  $region41: #{lstm_model_forward.1} parent=0 // pred_fallthru
    _
  // Predicated region
  $region42: #{lstm_model_forward.1} parent=0 // pred_check
    _
  $region43: #{lstm_model_forward.1} parent=0 // pred_check_branch
    %39 = sbr.rel (0) target = $region45
  $region44: #{lstm_model_forward.1} parent=0 // pred_region
    _
  $region45: #{lstm_model_forward.1} parent=0 // pred_fallthru
    _
  // Predicated region
  $region46: #{lstm_model_forward.1} parent=0 // pred_check
    _
  $region47: #{lstm_model_forward.1} parent=0 // pred_check_branch
    %41 = sbr.rel (0) target = $region49
  $region48: #{lstm_model_forward.1} parent=0 // pred_region
    _
  $region49: #{lstm_model_forward.1} parent=0 // pred_fallthru
    _
  // Predicated region
  $region50: #{lstm_model_forward.1} parent=0 // pred_check
    _
  $region51: #{lstm_model_forward.1} parent=0 // pred_check_branch
    %43 = sbr.rel (0) target = $region53
  $region52: #{lstm_model_forward.1} parent=0 // pred_region
    _
  $region53: #{lstm_model_forward.1} parent=0 // pred_fallthru
    _
  %v44 = vld [vmem:[%s0] sm:$0xff]
  %v45 = vld [vmem:[%s0 + $0x8] sm:$0xff]
  %v46 = vld [vmem:[%s0 + $0x10] sm:$0xff]
  %v47 = vld [vmem:[%s0 + $0x18] sm:$0xff]
  %v48 = vld [vmem:[%s0 + $0x20] sm:$0xff]
  %v49 = vld [vmem:[%s0 + $0x28] sm:$0xff]
  %v50 = vld [vmem:[%s0 + $0x30] sm:$0xff]
  %v51 = vld [vmem:[%s0 + $0x38] sm:$0xff]
  %v52 = vld [vmem:[%s1] sm:$0xff]
  %v53 = vld [vmem:[%s1 + $0x8] sm:$0xff]
  %v54 = vld [vmem:[%s3] sm:$0x1]
  %v56 = vlaneseq
  %v57 = vshrl.u32 %v56, 7
  %v58 = vsub.s32 0, %v57
  %v59 = vrot.slane %v54, %v58
  %vm61 = vcmask 130048
  %v63 = vsel %vm61, %v44, 0
  %v66 = vsel %vm61, %v45, 0
  %v69 = vsel %vm61, %v46, 0
  %v72 = vsel %vm61, %v47, 0
  %v75 = vsel %vm61, %v48, 0
  %v78 = vsel %vm61, %v49, 0
  %v81 = vsel %vm61, %v50, 0
  %v84 = vsel %vm61, %v51, 0
  %86 = vmatprep.subr.mxu0 0.0
  %87 = vmatpush1.msra.mxu0 0.0
  %88 = vmatprep.subr.mxu0 0.0
  %89 = vmatpush1.msra.mxu0 0.0
  %90 = vmatprep.subr.mxu0 0.0
  %91 = vmatpush1.msra.mxu0 0.0
  %92 = vmatprep.subr.mxu0 0.0
  %93 = vmatpush1.msra.mxu0 0.0
  %94 = vmatprep.subr.mxu0 0.0
  %95 = vmatpush1.msra.mxu0 0.0
  %96 = vmatprep.subr.mxu0 0.0
  %97 = vmatpush1.msra.mxu0 0.0
  %98 = vmatprep.subr.mxu0 0.0
  %99 = vmatpush1.msra.mxu0 0.0
  %100 = vmatprep.subr.mxu0 0.0
  %101 = vmatpush1.msra.mxu0 0.0
  %102 = vmatprep.subr.mxu0 0.0
  %103 = vmatpush1.msra.mxu0 0.0
  %104 = vmatprep.subr.mxu0 0.0
  %105 = vmatpush1.msra.mxu0 0.0
  %106 = vmatprep.subr.mxu0 0.0
  %107 = vmatpush1.msra.mxu0 0.0
  %108 = vmatprep.subr.mxu0 0.0
  %109 = vmatpush1.msra.mxu0 0.0
  %110 = vmatprep.subr.mxu0 0.0
  %111 = vmatpush1.msra.mxu0 0.0
  %112 = vmatprep.subr.mxu0 0.0
  %113 = vmatpush1.msra.mxu0 0.0
  %114 = vmatprep.subr.mxu0 0.0
  %115 = vmatpush1.msra.mxu0 %v53
  %116 = vmatprep.subr.mxu0 0.0
  %117 = vmatpush1.msra.mxu0 %v52
  %118 = vmatprep.subr.mxu0 0.0
  %119 = vmatpush2.msra.mxu0 0.0
  %120 = vmatprep.subr.mxu0 0.0
  %121 = vmatpush2.msra.mxu0 0.0
  %122 = vmatprep.subr.mxu0 0.0
  %123 = vmatpush2.msra.mxu0 0.0
  %124 = vmatprep.subr.mxu0 0.0
  %125 = vmatpush2.msra.mxu0 0.0
  %126 = vmatprep.subr.mxu0 0.0
  %127 = vmatpush2.msra.mxu0 0.0
  %128 = vmatprep.subr.mxu0 0.0
  %129 = vmatpush2.msra.mxu0 0.0
  %130 = vmatprep.subr.mxu0 0.0
  %131 = vmatpush2.msra.mxu0 0.0
  %132 = vmatprep.subr.mxu0 0.0
  %133 = vmatpush2.msra.mxu0 0.0
  %134 = vmatprep.subr.mxu0 0.0
  %135 = vmatpush2.msra.mxu0 0.0
  %136 = vmatprep.subr.mxu0 0.0
  %137 = vmatpush2.msra.mxu0 0.0
  %138 = vmatprep.subr.mxu0 0.0
  %139 = vmatpush2.msra.mxu0 0.0
  %140 = vmatprep.subr.mxu0 0.0
  %141 = vmatpush2.msra.mxu0 0.0
  %142 = vmatprep.subr.mxu0 0.0
  %143 = vmatpush2.msra.mxu0 0.0
  %144 = vmatprep.subr.mxu0 0.0
  %145 = vmatpush2.msra.mxu0 0.0
  %146 = vmatprep.subr.mxu0 0.0
  %147 = vmatpush2.msra.mxu0 0.0
  %148 = vmatprep.subr.mxu0 0.0
  %149 = vmatpush2.msra.mxu0 0.0
  %150 = vmatprep.mubr.f32.mxu0 0.0
  %151 = vmatmul.mubr.f32.gmra.mxu0 %v63
  %v152 = vpop.f32.mrf.mxu0
  %v153 = vadd.f32 %v59, %v152
  %v154 = vpop.f32.mrf.mxu0
  %155 = vmatprep.mubr.f32.mxu0 0.0
  %156 = vmatmul.mubr.f32.gmra.mxu0 %v66
  %v157 = vpop.f32.mrf.mxu0
  %v158 = vadd.f32 %v59, %v157
  %v159 = vpop.f32.mrf.mxu0
  %160 = vmatprep.mubr.f32.mxu0 0.0
  %161 = vmatmul.mubr.f32.gmra.mxu0 %v69
  %v162 = vpop.f32.mrf.mxu0
  %v163 = vadd.f32 %v59, %v162
  %v164 = vpop.f32.mrf.mxu0
  %165 = vmatprep.mubr.f32.mxu0 0.0
  %166 = vmatmul.mubr.f32.gmra.mxu0 %v72
  %v167 = vpop.f32.mrf.mxu0
  %v168 = vadd.f32 %v59, %v167
  %v169 = vpop.f32.mrf.mxu0
  %170 = vmatprep.mubr.f32.mxu0 0.0
  %171 = vmatmul.mubr.f32.gmra.mxu0 %v75
  %v172 = vpop.f32.mrf.mxu0
  %v173 = vadd.f32 %v59, %v172
  %v174 = vpop.f32.mrf.mxu0
  %175 = vmatprep.mubr.f32.mxu0 0.0
  %176 = vmatmul.mubr.f32.gmra.mxu0 %v78
  %v177 = vpop.f32.mrf.mxu0
  %v178 = vadd.f32 %v59, %v177
  %v179 = vpop.f32.mrf.mxu0
  %180 = vmatprep.mubr.f32.mxu0 0.0
  %181 = vmatmul.mubr.f32.gmra.mxu0 %v81
  %v182 = vpop.f32.mrf.mxu0
  %v183 = vadd.f32 %v59, %v182
  %v184 = vpop.f32.mrf.mxu0
  %185 = vmatprep.mubr.f32.mxu0 0.0
  %186 = vmatmul.mubr.f32.gmra.mxu0 %v84
  %v187 = vpop.f32.mrf.mxu0
  %v188 = vadd.f32 %v59, %v187
  %v189 = vpop.f32.mrf.mxu0
  %190 = vdwg.mxu0
  %191 = vst [vmem:[#allocation2] sm:$0xff] %v153
  %192 = vst [vmem:[#allocation2 + $0x8] sm:$0xff] %v158
  %193 = vst [vmem:[#allocation2 + $0x10] sm:$0xff] %v163
  %194 = vst [vmem:[#allocation2 + $0x18] sm:$0xff] %v168
  %195 = vst [vmem:[#allocation2 + $0x20] sm:$0xff] %v173
  %196 = vst [vmem:[#allocation2 + $0x28] sm:$0xff] %v178
  %197 = vst [vmem:[#allocation2 + $0x30] sm:$0xff] %v183
  %198 = vst [vmem:[#allocation2 + $0x38] sm:$0xff] %v188
  %v199 = vld [vmem:[%s2] sm:$0xff]
  %v200 = vld [vmem:[%s2 + $0x8] sm:$0xff]
  %v201 = vld [vmem:[%s2 + $0x10] sm:$0xff]
  %v202 = vld [vmem:[%s2 + $0x18] sm:$0xff]
  %v203 = vld [vmem:[#allocation2] sm:$0xff]
  %vm204 = vcmask 261120
  %v206 = vsel %vm204, 0.0, 0
  %208 = vmatprep.subr.mxu0 0.0
  %209 = vmatpush1.msra.mxu0 0.0
  %210 = vmatprep.subr.mxu0 0.0
  %211 = vmatpush1.msra.mxu0 0.0
  %212 = vmatprep.subr.mxu0 0.0
  %213 = vmatpush1.msra.mxu0 0.0
  %214 = vmatprep.subr.mxu0 0.0
  %215 = vmatpush1.msra.mxu0 0.0
  %216 = vmatprep.subr.mxu0 0.0
  %217 = vmatpush1.msra.mxu0 0.0
  %218 = vmatprep.subr.mxu0 0.0
  %219 = vmatpush1.msra.mxu0 0.0
  %220 = vmatprep.subr.mxu0 0.0
  %221 = vmatpush1.msra.mxu0 0.0
  %222 = vmatprep.subr.mxu0 0.0
  %223 = vmatpush1.msra.mxu0 0.0
  %224 = vmatprep.subr.mxu0 0.0
  %225 = vmatpush1.msra.mxu0 0.0
  %226 = vmatprep.subr.mxu0 0.0
  %227 = vmatpush1.msra.mxu0 0.0
  %228 = vmatprep.subr.mxu0 0.0
  %229 = vmatpush1.msra.mxu0 0.0
  %230 = vmatprep.subr.mxu0 0.0
  %231 = vmatpush1.msra.mxu0 0.0
  %232 = vmatprep.subr.mxu0 0.0
  %233 = vmatpush1.msra.mxu0 %v202
  %234 = vmatprep.subr.mxu0 0.0
  %235 = vmatpush1.msra.mxu0 %v201
  %236 = vmatprep.subr.mxu0 0.0
  %237 = vmatpush1.msra.mxu0 %v200
  %238 = vmatprep.subr.mxu0 0.0
  %239 = vmatpush1.msra.mxu0 %v199
  %240 = vmatprep.subr.mxu0 0.0
  %241 = vmatpush2.msra.mxu0 0.0
  %242 = vmatprep.subr.mxu0 0.0
  %243 = vmatpush2.msra.mxu0 0.0
  %244 = vmatprep.subr.mxu0 0.0
  %245 = vmatpush2.msra.mxu0 0.0
  %246 = vmatprep.subr.mxu0 0.0
  %247 = vmatpush2.msra.mxu0 0.0
  %248 = vmatprep.subr.mxu0 0.0
  %249 = vmatpush2.msra.mxu0 0.0
  %250 = vmatprep.subr.mxu0 0.0
  %251 = vmatpush2.msra.mxu0 0.0
  %252 = vmatprep.subr.mxu0 0.0
  %253 = vmatpush2.msra.mxu0 0.0
  %254 = vmatprep.subr.mxu0 0.0
  %255 = vmatpush2.msra.mxu0 0.0
  %256 = vmatprep.subr.mxu0 0.0
  %257 = vmatpush2.msra.mxu0 0.0
  %258 = vmatprep.subr.mxu0 0.0
  %259 = vmatpush2.msra.mxu0 0.0
  %260 = vmatprep.subr.mxu0 0.0
  %261 = vmatpush2.msra.mxu0 0.0
  %262 = vmatprep.subr.mxu0 0.0
  %263 = vmatpush2.msra.mxu0 0.0
  %264 = vmatprep.subr.mxu0 0.0
  %265 = vmatpush2.msra.mxu0 0.0
  %266 = vmatprep.subr.mxu0 0.0
  %267 = vmatpush2.msra.mxu0 0.0
  %268 = vmatprep.subr.mxu0 0.0
  %269 = vmatpush2.msra.mxu0 0.0
  %270 = vmatprep.subr.mxu0 0.0
  %271 = vmatpush2.msra.mxu0 0.0
  %272 = vmatprep.mubr.f32.mxu0 0.0
  %273 = vmatmul.mubr.f32.gmra.mxu0 %v206
  %v274 = vpop.f32.mrf.mxu0
  %v275 = vadd.f32 0.0, %v274
  %v276 = vpop.f32.mrf.mxu0
  %277 = vdwg.mxu0
  %v278 = vadd.f32 %v203, %v275
  %v279 = vxor.u32 %v278, 2147483648
  %v280 = vmul.f32 %v279, 1.442695
  %v281 = vpow.pop %v280
  %v282 = vadd.f32 %v281, 1.0
  %v283 = vrcp.pop %v282
  %v284 = vmul.f32 1.0, %v283
  %v285 = vtanh.pop %v278
  %v286 = vmul.f32 %v284, 0.0
  %288 = vrot.lane.b32.xlu0 %v285, 64
  %v289 = vpop.permute.xlu0 %288
  %v291 = vmul.f32 %v284, %v289
  %293 = vrot.lane.b32.xlu0 %v291, 32
  %v294 = vpop.permute.xlu0 %293
  %v296 = vadd.f32 %v286, %v294
  %v297 = vtanh.pop %v296
  %299 = vrot.lane.b32.xlu0 %v297, 64
  %v300 = vpop.permute.xlu0 %299
  %v302 = vmul.f32 %v284, %v300
  %304 = vrot.lane.b32.xlu0 %v302, 32
  %v305 = vpop.permute.xlu0 %304
  %307 = vst.msk [vmem:[#allocation3] sm:$0xff] %vm204, %v305
  %s308 = scalar_lea.vmem [#allocation2], 8
  %v309 = vld [vmem:[%s308] sm:$0xff]
  %v310 = vsel %vm204, %v305, 0
  %312 = vmatprep.subr.mxu0 0.0
  %313 = vmatpush1.msra.mxu0 0.0
  %314 = vmatprep.subr.mxu0 0.0
  %315 = vmatpush1.msra.mxu0 0.0
  %316 = vmatprep.subr.mxu0 0.0
  %317 = vmatpush1.msra.mxu0 0.0
  %318 = vmatprep.subr.mxu0 0.0
  %319 = vmatpush1.msra.mxu0 0.0
  %320 = vmatprep.subr.mxu0 0.0
  %321 = vmatpush1.msra.mxu0 0.0
  %322 = vmatprep.subr.mxu0 0.0
  %323 = vmatpush1.msra.mxu0 0.0
  %324 = vmatprep.subr.mxu0 0.0
  %325 = vmatpush1.msra.mxu0 0.0
  %326 = vmatprep.subr.mxu0 0.0
  %327 = vmatpush1.msra.mxu0 0.0
  %328 = vmatprep.subr.mxu0 0.0
  %329 = vmatpush1.msra.mxu0 0.0
  %330 = vmatprep.subr.mxu0 0.0
  %331 = vmatpush1.msra.mxu0 0.0
  %332 = vmatprep.subr.mxu0 0.0
  %333 = vmatpush1.msra.mxu0 0.0
  %334 = vmatprep.subr.mxu0 0.0
  %335 = vmatpush1.msra.mxu0 0.0
  %336 = vmatprep.subr.mxu0 0.0
  %337 = vmatpush1.msra.mxu0 %v202
  %338 = vmatprep.subr.mxu0 0.0
  %339 = vmatpush1.msra.mxu0 %v201
  %340 = vmatprep.subr.mxu0 0.0
  %341 = vmatpush1.msra.mxu0 %v200
  %342 = vmatprep.subr.mxu0 0.0
  %343 = vmatpush1.msra.mxu0 %v199
  %344 = vmatprep.subr.mxu0 0.0
  %345 = vmatpush2.msra.mxu0 0.0
  %346 = vmatprep.subr.mxu0 0.0
  %347 = vmatpush2.msra.mxu0 0.0
  %348 = vmatprep.subr.mxu0 0.0
  %349 = vmatpush2.msra.mxu0 0.0
  %350 = vmatprep.subr.mxu0 0.0
  %351 = vmatpush2.msra.mxu0 0.0
  %352 = vmatprep.subr.mxu0 0.0
  %353 = vmatpush2.msra.mxu0 0.0
  %354 = vmatprep.subr.mxu0 0.0
  %355 = vmatpush2.msra.mxu0 0.0
  %356 = vmatprep.subr.mxu0 0.0
  %357 = vmatpush2.msra.mxu0 0.0
  %358 = vmatprep.subr.mxu0 0.0
  %359 = vmatpush2.msra.mxu0 0.0
  %360 = vmatprep.subr.mxu0 0.0
  %361 = vmatpush2.msra.mxu0 0.0
  %362 = vmatprep.subr.mxu0 0.0
  %363 = vmatpush2.msra.mxu0 0.0
  %364 = vmatprep.subr.mxu0 0.0
  %365 = vmatpush2.msra.mxu0 0.0
  %366 = vmatprep.subr.mxu0 0.0
  %367 = vmatpush2.msra.mxu0 0.0
  %368 = vmatprep.subr.mxu0 0.0
  %369 = vmatpush2.msra.mxu0 0.0
  %370 = vmatprep.subr.mxu0 0.0
  %371 = vmatpush2.msra.mxu0 0.0
  %372 = vmatprep.subr.mxu0 0.0
  %373 = vmatpush2.msra.mxu0 0.0
  %374 = vmatprep.subr.mxu0 0.0
  %375 = vmatpush2.msra.mxu0 0.0
  %376 = vmatprep.mubr.f32.mxu0 0.0
  %377 = vmatmul.mubr.f32.gmra.mxu0 %v310
  %v378 = vpop.f32.mrf.mxu0
  %v379 = vadd.f32 0.0, %v378
  %v380 = vpop.f32.mrf.mxu0
  %381 = vdwg.mxu0
  %v382 = vadd.f32 %v309, %v379
  %v383 = vxor.u32 %v382, 2147483648
  %v384 = vmul.f32 %v383, 1.442695
  %v385 = vpow.pop %v384
  %v386 = vadd.f32 %v385, 1.0
  %v387 = vrcp.pop %v386
  %v388 = vmul.f32 1.0, %v387
  %v389 = vtanh.pop %v382
  %v390 = vmul.f32 %v388, %v296
  %392 = vrot.lane.b32.xlu0 %v389, 64
  %v393 = vpop.permute.xlu0 %392
  %v395 = vmul.f32 %v388, %v393
  %397 = vrot.lane.b32.xlu0 %v395, 32
  %v398 = vpop.permute.xlu0 %397
  %v400 = vadd.f32 %v390, %v398
  %v401 = vtanh.pop %v400
  %403 = vrot.lane.b32.xlu0 %v401, 64
  %v404 = vpop.permute.xlu0 %403
  %v406 = vmul.f32 %v388, %v404
  %408 = vrot.lane.b32.xlu0 %v406, 32
  %v409 = vpop.permute.xlu0 %408
  %s411 = scalar_lea.vmem [#allocation3], 8
  %412 = vst.msk [vmem:[%s411] sm:$0xff] %vm204, %v409
  %s413 = scalar_lea.vmem [#allocation2], 16
  %v414 = vld [vmem:[%s413] sm:$0xff]
  %v415 = vsel %vm204, %v409, 0
  %417 = vmatprep.subr.mxu0 0.0
  %418 = vmatpush1.msra.mxu0 0.0
  %419 = vmatprep.subr.mxu0 0.0
  %420 = vmatpush1.msra.mxu0 0.0
  %421 = vmatprep.subr.mxu0 0.0
  %422 = vmatpush1.msra.mxu0 0.0
  %423 = vmatprep.subr.mxu0 0.0
  %424 = vmatpush1.msra.mxu0 0.0
  %425 = vmatprep.subr.mxu0 0.0
  %426 = vmatpush1.msra.mxu0 0.0
  %427 = vmatprep.subr.mxu0 0.0
  %428 = vmatpush1.msra.mxu0 0.0
  %429 = vmatprep.subr.mxu0 0.0
  %430 = vmatpush1.msra.mxu0 0.0
  %431 = vmatprep.subr.mxu0 0.0
  %432 = vmatpush1.msra.mxu0 0.0
  %433 = vmatprep.subr.mxu0 0.0
  %434 = vmatpush1.msra.mxu0 0.0
  %435 = vmatprep.subr.mxu0 0.0
  %436 = vmatpush1.msra.mxu0 0.0
  %437 = vmatprep.subr.mxu0 0.0
  %438 = vmatpush1.msra.mxu0 0.0
  %439 = vmatprep.subr.mxu0 0.0
  %440 = vmatpush1.msra.mxu0 0.0
  %441 = vmatprep.subr.mxu0 0.0
  %442 = vmatpush1.msra.mxu0 %v202
  %443 = vmatprep.subr.mxu0 0.0
  %444 = vmatpush1.msra.mxu0 %v201
  %445 = vmatprep.subr.mxu0 0.0
  %446 = vmatpush1.msra.mxu0 %v200
  %447 = vmatprep.subr.mxu0 0.0
  %448 = vmatpush1.msra.mxu0 %v199
  %449 = vmatprep.subr.mxu0 0.0
  %450 = vmatpush2.msra.mxu0 0.0
  %451 = vmatprep.subr.mxu0 0.0
  %452 = vmatpush2.msra.mxu0 0.0
  %453 = vmatprep.subr.mxu0 0.0
  %454 = vmatpush2.msra.mxu0 0.0
  %455 = vmatprep.subr.mxu0 0.0
  %456 = vmatpush2.msra.mxu0 0.0
  %457 = vmatprep.subr.mxu0 0.0
  %458 = vmatpush2.msra.mxu0 0.0
  %459 = vmatprep.subr.mxu0 0.0
  %460 = vmatpush2.msra.mxu0 0.0
  %461 = vmatprep.subr.mxu0 0.0
  %462 = vmatpush2.msra.mxu0 0.0
  %463 = vmatprep.subr.mxu0 0.0
  %464 = vmatpush2.msra.mxu0 0.0
  %465 = vmatprep.subr.mxu0 0.0
  %466 = vmatpush2.msra.mxu0 0.0
  %467 = vmatprep.subr.mxu0 0.0
  %468 = vmatpush2.msra.mxu0 0.0
  %469 = vmatprep.subr.mxu0 0.0
  %470 = vmatpush2.msra.mxu0 0.0
  %471 = vmatprep.subr.mxu0 0.0
  %472 = vmatpush2.msra.mxu0 0.0
  %473 = vmatprep.subr.mxu0 0.0
  %474 = vmatpush2.msra.mxu0 0.0
  %475 = vmatprep.subr.mxu0 0.0
  %476 = vmatpush2.msra.mxu0 0.0
  %477 = vmatprep.subr.mxu0 0.0
  %478 = vmatpush2.msra.mxu0 0.0
  %479 = vmatprep.subr.mxu0 0.0
  %480 = vmatpush2.msra.mxu0 0.0
  %481 = vmatprep.mubr.f32.mxu0 0.0
  %482 = vmatmul.mubr.f32.gmra.mxu0 %v415
  %v483 = vpop.f32.mrf.mxu0
  %v484 = vadd.f32 0.0, %v483
  %v485 = vpop.f32.mrf.mxu0
  %486 = vdwg.mxu0
  %v487 = vadd.f32 %v414, %v484
  %v488 = vxor.u32 %v487, 2147483648
  %v489 = vmul.f32 %v488, 1.442695
  %v490 = vpow.pop %v489
  %v491 = vadd.f32 %v490, 1.0
  %v492 = vrcp.pop %v491
  %v493 = vmul.f32 1.0, %v492
  %v494 = vtanh.pop %v487
  %v495 = vmul.f32 %v493, %v400
  %497 = vrot.lane.b32.xlu0 %v494, 64
  %v498 = vpop.permute.xlu0 %497
  %v500 = vmul.f32 %v493, %v498
  %502 = vrot.lane.b32.xlu0 %v500, 32
  %v503 = vpop.permute.xlu0 %502
  %v505 = vadd.f32 %v495, %v503
  %v506 = vtanh.pop %v505
  %508 = vrot.lane.b32.xlu0 %v506, 64
  %v509 = vpop.permute.xlu0 %508
  %v511 = vmul.f32 %v493, %v509
  %513 = vrot.lane.b32.xlu0 %v511, 32
  %v514 = vpop.permute.xlu0 %513
  %s516 = scalar_lea.vmem [#allocation3], 16
  %517 = vst.msk [vmem:[%s516] sm:$0xff] %vm204, %v514
  %s518 = scalar_lea.vmem [#allocation2], 24
  %v519 = vld [vmem:[%s518] sm:$0xff]
  %v520 = vsel %vm204, %v514, 0
  %522 = vmatprep.subr.mxu0 0.0
  %523 = vmatpush1.msra.mxu0 0.0
  %524 = vmatprep.subr.mxu0 0.0
  %525 = vmatpush1.msra.mxu0 0.0
  %526 = vmatprep.subr.mxu0 0.0
  %527 = vmatpush1.msra.mxu0 0.0
  %528 = vmatprep.subr.mxu0 0.0
  %529 = vmatpush1.msra.mxu0 0.0
  %530 = vmatprep.subr.mxu0 0.0
  %531 = vmatpush1.msra.mxu0 0.0
  %532 = vmatprep.subr.mxu0 0.0
  %533 = vmatpush1.msra.mxu0 0.0
  %534 = vmatprep.subr.mxu0 0.0
  %535 = vmatpush1.msra.mxu0 0.0
  %536 = vmatprep.subr.mxu0 0.0
  %537 = vmatpush1.msra.mxu0 0.0
  %538 = vmatprep.subr.mxu0 0.0
  %539 = vmatpush1.msra.mxu0 0.0
  %540 = vmatprep.subr.mxu0 0.0
  %541 = vmatpush1.msra.mxu0 0.0
  %542 = vmatprep.subr.mxu0 0.0
  %543 = vmatpush1.msra.mxu0 0.0
  %544 = vmatprep.subr.mxu0 0.0
  %545 = vmatpush1.msra.mxu0 0.0
  %546 = vmatprep.subr.mxu0 0.0
  %547 = vmatpush1.msra.mxu0 %v202
  %548 = vmatprep.subr.mxu0 0.0
  %549 = vmatpush1.msra.mxu0 %v201
  %550 = vmatprep.subr.mxu0 0.0
  %551 = vmatpush1.msra.mxu0 %v200
  %552 = vmatprep.subr.mxu0 0.0
  %553 = vmatpush1.msra.mxu0 %v199
  %554 = vmatprep.subr.mxu0 0.0
  %555 = vmatpush2.msra.mxu0 0.0
  %556 = vmatprep.subr.mxu0 0.0
  %557 = vmatpush2.msra.mxu0 0.0
  %558 = vmatprep.subr.mxu0 0.0
  %559 = vmatpush2.msra.mxu0 0.0
  %560 = vmatprep.subr.mxu0 0.0
  %561 = vmatpush2.msra.mxu0 0.0
  %562 = vmatprep.subr.mxu0 0.0
  %563 = vmatpush2.msra.mxu0 0.0
  %564 = vmatprep.subr.mxu0 0.0
  %565 = vmatpush2.msra.mxu0 0.0
  %566 = vmatprep.subr.mxu0 0.0
  %567 = vmatpush2.msra.mxu0 0.0
  %568 = vmatprep.subr.mxu0 0.0
  %569 = vmatpush2.msra.mxu0 0.0
  %570 = vmatprep.subr.mxu0 0.0
  %571 = vmatpush2.msra.mxu0 0.0
  %572 = vmatprep.subr.mxu0 0.0
  %573 = vmatpush2.msra.mxu0 0.0
  %574 = vmatprep.subr.mxu0 0.0
  %575 = vmatpush2.msra.mxu0 0.0
  %576 = vmatprep.subr.mxu0 0.0
  %577 = vmatpush2.msra.mxu0 0.0
  %578 = vmatprep.subr.mxu0 0.0
  %579 = vmatpush2.msra.mxu0 0.0
  %580 = vmatprep.subr.mxu0 0.0
  %581 = vmatpush2.msra.mxu0 0.0
  %582 = vmatprep.subr.mxu0 0.0
  %583 = vmatpush2.msra.mxu0 0.0
  %584 = vmatprep.subr.mxu0 0.0
  %585 = vmatpush2.msra.mxu0 0.0
  %586 = vmatprep.mubr.f32.mxu0 0.0
  %587 = vmatmul.mubr.f32.gmra.mxu0 %v520
  %v588 = vpop.f32.mrf.mxu0
  %v589 = vadd.f32 0.0, %v588
  %v590 = vpop.f32.mrf.mxu0
  %591 = vdwg.mxu0
  %v592 = vadd.f32 %v519, %v589
  %v593 = vxor.u32 %v592, 2147483648
  %v594 = vmul.f32 %v593, 1.442695
  %v595 = vpow.pop %v594
  %v596 = vadd.f32 %v595, 1.0
  %v597 = vrcp.pop %v596
  %v598 = vmul.f32 1.0, %v597
  %v599 = vtanh.pop %v592
  %v600 = vmul.f32 %v598, %v505
  %602 = vrot.lane.b32.xlu0 %v599, 64
  %v603 = vpop.permute.xlu0 %602
  %v605 = vmul.f32 %v598, %v603
  %607 = vrot.lane.b32.xlu0 %v605, 32
  %v608 = vpop.permute.xlu0 %607
  %v610 = vadd.f32 %v600, %v608
  %v611 = vtanh.pop %v610
  %613 = vrot.lane.b32.xlu0 %v611, 64
  %v614 = vpop.permute.xlu0 %613
  %v616 = vmul.f32 %v598, %v614
  %618 = vrot.lane.b32.xlu0 %v616, 32
  %v619 = vpop.permute.xlu0 %618
  %s621 = scalar_lea.vmem [#allocation3], 24
  %622 = vst.msk [vmem:[%s621] sm:$0xff] %vm204, %v619
  %s623 = scalar_lea.vmem [#allocation2], 32
  %v624 = vld [vmem:[%s623] sm:$0xff]
  %v625 = vsel %vm204, %v619, 0
  %627 = vmatprep.subr.mxu0 0.0
  %628 = vmatpush1.msra.mxu0 0.0
  %629 = vmatprep.subr.mxu0 0.0
  %630 = vmatpush1.msra.mxu0 0.0
  %631 = vmatprep.subr.mxu0 0.0
  %632 = vmatpush1.msra.mxu0 0.0
  %633 = vmatprep.subr.mxu0 0.0
  %634 = vmatpush1.msra.mxu0 0.0
  %635 = vmatprep.subr.mxu0 0.0
  %636 = vmatpush1.msra.mxu0 0.0
  %637 = vmatprep.subr.mxu0 0.0
  %638 = vmatpush1.msra.mxu0 0.0
  %639 = vmatprep.subr.mxu0 0.0
  %640 = vmatpush1.msra.mxu0 0.0
  %641 = vmatprep.subr.mxu0 0.0
  %642 = vmatpush1.msra.mxu0 0.0
  %643 = vmatprep.subr.mxu0 0.0
  %644 = vmatpush1.msra.mxu0 0.0
  %645 = vmatprep.subr.mxu0 0.0
  %646 = vmatpush1.msra.mxu0 0.0
  %647 = vmatprep.subr.mxu0 0.0
  %648 = vmatpush1.msra.mxu0 0.0
  %649 = vmatprep.subr.mxu0 0.0
  %650 = vmatpush1.msra.mxu0 0.0
  %651 = vmatprep.subr.mxu0 0.0
  %652 = vmatpush1.msra.mxu0 %v202
  %653 = vmatprep.subr.mxu0 0.0
  %654 = vmatpush1.msra.mxu0 %v201
  %655 = vmatprep.subr.mxu0 0.0
  %656 = vmatpush1.msra.mxu0 %v200
  %657 = vmatprep.subr.mxu0 0.0
  %658 = vmatpush1.msra.mxu0 %v199
  %659 = vmatprep.subr.mxu0 0.0
  %660 = vmatpush2.msra.mxu0 0.0
  %661 = vmatprep.subr.mxu0 0.0
  %662 = vmatpush2.msra.mxu0 0.0
  %663 = vmatprep.subr.mxu0 0.0
  %664 = vmatpush2.msra.mxu0 0.0
  %665 = vmatprep.subr.mxu0 0.0
  %666 = vmatpush2.msra.mxu0 0.0
  %667 = vmatprep.subr.mxu0 0.0
  %668 = vmatpush2.msra.mxu0 0.0
  %669 = vmatprep.subr.mxu0 0.0
  %670 = vmatpush2.msra.mxu0 0.0
  %671 = vmatprep.subr.mxu0 0.0
  %672 = vmatpush2.msra.mxu0 0.0
  %673 = vmatprep.subr.mxu0 0.0
  %674 = vmatpush2.msra.mxu0 0.0
  %675 = vmatprep.subr.mxu0 0.0
  %676 = vmatpush2.msra.mxu0 0.0
  %677 = vmatprep.subr.mxu0 0.0
  %678 = vmatpush2.msra.mxu0 0.0
  %679 = vmatprep.subr.mxu0 0.0
  %680 = vmatpush2.msra.mxu0 0.0
  %681 = vmatprep.subr.mxu0 0.0
  %682 = vmatpush2.msra.mxu0 0.0
  %683 = vmatprep.subr.mxu0 0.0
  %684 = vmatpush2.msra.mxu0 0.0
  %685 = vmatprep.subr.mxu0 0.0
  %686 = vmatpush2.msra.mxu0 0.0
  %687 = vmatprep.subr.mxu0 0.0
  %688 = vmatpush2.msra.mxu0 0.0
  %689 = vmatprep.subr.mxu0 0.0
  %690 = vmatpush2.msra.mxu0 0.0
  %691 = vmatprep.mubr.f32.mxu0 0.0
  %692 = vmatmul.mubr.f32.gmra.mxu0 %v625
  %v693 = vpop.f32.mrf.mxu0
  %v694 = vadd.f32 0.0, %v693
  %v695 = vpop.f32.mrf.mxu0
  %696 = vdwg.mxu0
  %v697 = vadd.f32 %v624, %v694
  %v698 = vxor.u32 %v697, 2147483648
  %v699 = vmul.f32 %v698, 1.442695
  %v700 = vpow.pop %v699
  %v701 = vadd.f32 %v700, 1.0
  %v702 = vrcp.pop %v701
  %v703 = vmul.f32 1.0, %v702
  %v704 = vtanh.pop %v697
  %v705 = vmul.f32 %v703, %v610
  %707 = vrot.lane.b32.xlu0 %v704, 64
  %v708 = vpop.permute.xlu0 %707
  %v710 = vmul.f32 %v703, %v708
  %712 = vrot.lane.b32.xlu0 %v710, 32
  %v713 = vpop.permute.xlu0 %712
  %v715 = vadd.f32 %v705, %v713
  %v716 = vtanh.pop %v715
  %718 = vrot.lane.b32.xlu0 %v716, 64
  %v719 = vpop.permute.xlu0 %718
  %v721 = vmul.f32 %v703, %v719
  %723 = vrot.lane.b32.xlu0 %v721, 32
  %v724 = vpop.permute.xlu0 %723
  %s726 = scalar_lea.vmem [#allocation3], 32
  %727 = vst.msk [vmem:[%s726] sm:$0xff] %vm204, %v724
  %s728 = scalar_lea.vmem [#allocation2], 40
  %v729 = vld [vmem:[%s728] sm:$0xff]
  %v730 = vsel %vm204, %v724, 0
  %732 = vmatprep.subr.mxu0 0.0
  %733 = vmatpush1.msra.mxu0 0.0
  %734 = vmatprep.subr.mxu0 0.0
  %735 = vmatpush1.msra.mxu0 0.0
  %736 = vmatprep.subr.mxu0 0.0
  %737 = vmatpush1.msra.mxu0 0.0
  %738 = vmatprep.subr.mxu0 0.0
  %739 = vmatpush1.msra.mxu0 0.0
  %740 = vmatprep.subr.mxu0 0.0
  %741 = vmatpush1.msra.mxu0 0.0
  %742 = vmatprep.subr.mxu0 0.0
  %743 = vmatpush1.msra.mxu0 0.0
  %744 = vmatprep.subr.mxu0 0.0
  %745 = vmatpush1.msra.mxu0 0.0
  %746 = vmatprep.subr.mxu0 0.0
  %747 = vmatpush1.msra.mxu0 0.0
  %748 = vmatprep.subr.mxu0 0.0
  %749 = vmatpush1.msra.mxu0 0.0
  %750 = vmatprep.subr.mxu0 0.0
  %751 = vmatpush1.msra.mxu0 0.0
  %752 = vmatprep.subr.mxu0 0.0
  %753 = vmatpush1.msra.mxu0 0.0
  %754 = vmatprep.subr.mxu0 0.0
  %755 = vmatpush1.msra.mxu0 0.0
  %756 = vmatprep.subr.mxu0 0.0
  %757 = vmatpush1.msra.mxu0 %v202
  %758 = vmatprep.subr.mxu0 0.0
  %759 = vmatpush1.msra.mxu0 %v201
  %760 = vmatprep.subr.mxu0 0.0
  %761 = vmatpush1.msra.mxu0 %v200
  %762 = vmatprep.subr.mxu0 0.0
  %763 = vmatpush1.msra.mxu0 %v199
  %764 = vmatprep.subr.mxu0 0.0
  %765 = vmatpush2.msra.mxu0 0.0
  %766 = vmatprep.subr.mxu0 0.0
  %767 = vmatpush2.msra.mxu0 0.0
  %768 = vmatprep.subr.mxu0 0.0
  %769 = vmatpush2.msra.mxu0 0.0
  %770 = vmatprep.subr.mxu0 0.0
  %771 = vmatpush2.msra.mxu0 0.0
  %772 = vmatprep.subr.mxu0 0.0
  %773 = vmatpush2.msra.mxu0 0.0
  %774 = vmatprep.subr.mxu0 0.0
  %775 = vmatpush2.msra.mxu0 0.0
  %776 = vmatprep.subr.mxu0 0.0
  %777 = vmatpush2.msra.mxu0 0.0
  %778 = vmatprep.subr.mxu0 0.0
  %779 = vmatpush2.msra.mxu0 0.0
  %780 = vmatprep.subr.mxu0 0.0
  %781 = vmatpush2.msra.mxu0 0.0
  %782 = vmatprep.subr.mxu0 0.0
  %783 = vmatpush2.msra.mxu0 0.0
  %784 = vmatprep.subr.mxu0 0.0
  %785 = vmatpush2.msra.mxu0 0.0
  %786 = vmatprep.subr.mxu0 0.0
  %787 = vmatpush2.msra.mxu0 0.0
  %788 = vmatprep.subr.mxu0 0.0
  %789 = vmatpush2.msra.mxu0 0.0
  %790 = vmatprep.subr.mxu0 0.0
  %791 = vmatpush2.msra.mxu0 0.0
  %792 = vmatprep.subr.mxu0 0.0
  %793 = vmatpush2.msra.mxu0 0.0
  %794 = vmatprep.subr.mxu0 0.0
  %795 = vmatpush2.msra.mxu0 0.0
  %796 = vmatprep.mubr.f32.mxu0 0.0
  %797 = vmatmul.mubr.f32.gmra.mxu0 %v730
  %v798 = vpop.f32.mrf.mxu0
  %v799 = vadd.f32 0.0, %v798
  %v800 = vpop.f32.mrf.mxu0
  %801 = vdwg.mxu0
  %v802 = vadd.f32 %v729, %v799
  %v803 = vxor.u32 %v802, 2147483648
  %v804 = vmul.f32 %v803, 1.442695
  %v805 = vpow.pop %v804
  %v806 = vadd.f32 %v805, 1.0
  %v807 = vrcp.pop %v806
  %v808 = vmul.f32 1.0, %v807
  %v809 = vtanh.pop %v802
  %v810 = vmul.f32 %v808, %v715
  %812 = vrot.lane.b32.xlu0 %v809, 64
  %v813 = vpop.permute.xlu0 %812
  %v815 = vmul.f32 %v808, %v813
  %817 = vrot.lane.b32.xlu0 %v815, 32
  %v818 = vpop.permute.xlu0 %817
  %v820 = vadd.f32 %v810, %v818
  %v821 = vtanh.pop %v820
  %823 = vrot.lane.b32.xlu0 %v821, 64
  %v824 = vpop.permute.xlu0 %823
  %v826 = vmul.f32 %v808, %v824
  %828 = vrot.lane.b32.xlu0 %v826, 32
  %v829 = vpop.permute.xlu0 %828
  %s831 = scalar_lea.vmem [#allocation3], 40
  %832 = vst.msk [vmem:[%s831] sm:$0xff] %vm204, %v829
  %s833 = scalar_lea.vmem [#allocation2], 48
  %v834 = vld [vmem:[%s833] sm:$0xff]
  %v835 = vsel %vm204, %v829, 0
  %837 = vmatprep.subr.mxu0 0.0
  %838 = vmatpush1.msra.mxu0 0.0
  %839 = vmatprep.subr.mxu0 0.0
  %840 = vmatpush1.msra.mxu0 0.0
  %841 = vmatprep.subr.mxu0 0.0
  %842 = vmatpush1.msra.mxu0 0.0
  %843 = vmatprep.subr.mxu0 0.0
  %844 = vmatpush1.msra.mxu0 0.0
  %845 = vmatprep.subr.mxu0 0.0
  %846 = vmatpush1.msra.mxu0 0.0
  %847 = vmatprep.subr.mxu0 0.0
  %848 = vmatpush1.msra.mxu0 0.0
  %849 = vmatprep.subr.mxu0 0.0
  %850 = vmatpush1.msra.mxu0 0.0
  %851 = vmatprep.subr.mxu0 0.0
  %852 = vmatpush1.msra.mxu0 0.0
  %853 = vmatprep.subr.mxu0 0.0
  %854 = vmatpush1.msra.mxu0 0.0
  %855 = vmatprep.subr.mxu0 0.0
  %856 = vmatpush1.msra.mxu0 0.0
  %857 = vmatprep.subr.mxu0 0.0
  %858 = vmatpush1.msra.mxu0 0.0
  %859 = vmatprep.subr.mxu0 0.0
  %860 = vmatpush1.msra.mxu0 0.0
  %861 = vmatprep.subr.mxu0 0.0
  %862 = vmatpush1.msra.mxu0 %v202
  %863 = vmatprep.subr.mxu0 0.0
  %864 = vmatpush1.msra.mxu0 %v201
  %865 = vmatprep.subr.mxu0 0.0
  %866 = vmatpush1.msra.mxu0 %v200
  %867 = vmatprep.subr.mxu0 0.0
  %868 = vmatpush1.msra.mxu0 %v199
  %869 = vmatprep.subr.mxu0 0.0
  %870 = vmatpush2.msra.mxu0 0.0
  %871 = vmatprep.subr.mxu0 0.0
  %872 = vmatpush2.msra.mxu0 0.0
  %873 = vmatprep.subr.mxu0 0.0
  %874 = vmatpush2.msra.mxu0 0.0
  %875 = vmatprep.subr.mxu0 0.0
  %876 = vmatpush2.msra.mxu0 0.0
  %877 = vmatprep.subr.mxu0 0.0
  %878 = vmatpush2.msra.mxu0 0.0
  %879 = vmatprep.subr.mxu0 0.0
  %880 = vmatpush2.msra.mxu0 0.0
  %881 = vmatprep.subr.mxu0 0.0
  %882 = vmatpush2.msra.mxu0 0.0
  %883 = vmatprep.subr.mxu0 0.0
  %884 = vmatpush2.msra.mxu0 0.0
  %885 = vmatprep.subr.mxu0 0.0
  %886 = vmatpush2.msra.mxu0 0.0
  %887 = vmatprep.subr.mxu0 0.0
  %888 = vmatpush2.msra.mxu0 0.0
  %889 = vmatprep.subr.mxu0 0.0
  %890 = vmatpush2.msra.mxu0 0.0
  %891 = vmatprep.subr.mxu0 0.0
  %892 = vmatpush2.msra.mxu0 0.0
  %893 = vmatprep.subr.mxu0 0.0
  %894 = vmatpush2.msra.mxu0 0.0
  %895 = vmatprep.subr.mxu0 0.0
  %896 = vmatpush2.msra.mxu0 0.0
  %897 = vmatprep.subr.mxu0 0.0
  %898 = vmatpush2.msra.mxu0 0.0
  %899 = vmatprep.subr.mxu0 0.0
  %900 = vmatpush2.msra.mxu0 0.0
  %901 = vmatprep.mubr.f32.mxu0 0.0
  %902 = vmatmul.mubr.f32.gmra.mxu0 %v835
  %v903 = vpop.f32.mrf.mxu0
  %v904 = vadd.f32 0.0, %v903
  %v905 = vpop.f32.mrf.mxu0
  %906 = vdwg.mxu0
  %v907 = vadd.f32 %v834, %v904
  %v908 = vxor.u32 %v907, 2147483648
  %v909 = vmul.f32 %v908, 1.442695
  %v910 = vpow.pop %v909
  %v911 = vadd.f32 %v910, 1.0
  %v912 = vrcp.pop %v911
  %v913 = vmul.f32 1.0, %v912
  %v914 = vtanh.pop %v907
  %v915 = vmul.f32 %v913, %v820
  %917 = vrot.lane.b32.xlu0 %v914, 64
  %v918 = vpop.permute.xlu0 %917
  %v920 = vmul.f32 %v913, %v918
  %922 = vrot.lane.b32.xlu0 %v920, 32
  %v923 = vpop.permute.xlu0 %922
  %v925 = vadd.f32 %v915, %v923
  %v926 = vtanh.pop %v925
  %928 = vrot.lane.b32.xlu0 %v926, 64
  %v929 = vpop.permute.xlu0 %928
  %v931 = vmul.f32 %v913, %v929
  %933 = vrot.lane.b32.xlu0 %v931, 32
  %v934 = vpop.permute.xlu0 %933
  %s936 = scalar_lea.vmem [#allocation3], 48
  %937 = vst.msk [vmem:[%s936] sm:$0xff] %vm204, %v934
  %s938 = scalar_lea.vmem [#allocation2], 56
  %v939 = vld [vmem:[%s938] sm:$0xff]
  %v940 = vsel %vm204, %v934, 0
  %942 = vmatprep.subr.mxu0 0.0
  %943 = vmatpush1.msra.mxu0 0.0
  %944 = vmatprep.subr.mxu0 0.0
  %945 = vmatpush1.msra.mxu0 0.0
  %946 = vmatprep.subr.mxu0 0.0
  %947 = vmatpush1.msra.mxu0 0.0
  %948 = vmatprep.subr.mxu0 0.0
  %949 = vmatpush1.msra.mxu0 0.0
  %950 = vmatprep.subr.mxu0 0.0
  %951 = vmatpush1.msra.mxu0 0.0
  %952 = vmatprep.subr.mxu0 0.0
  %953 = vmatpush1.msra.mxu0 0.0
  %954 = vmatprep.subr.mxu0 0.0
  %955 = vmatpush1.msra.mxu0 0.0
  %956 = vmatprep.subr.mxu0 0.0
  %957 = vmatpush1.msra.mxu0 0.0
  %958 = vmatprep.subr.mxu0 0.0
  %959 = vmatpush1.msra.mxu0 0.0
  %960 = vmatprep.subr.mxu0 0.0
  %961 = vmatpush1.msra.mxu0 0.0
  %962 = vmatprep.subr.mxu0 0.0
  %963 = vmatpush1.msra.mxu0 0.0
  %964 = vmatprep.subr.mxu0 0.0
  %965 = vmatpush1.msra.mxu0 0.0
  %966 = vmatprep.subr.mxu0 0.0
  %967 = vmatpush1.msra.mxu0 %v202
  %968 = vmatprep.subr.mxu0 0.0
  %969 = vmatpush1.msra.mxu0 %v201
  %970 = vmatprep.subr.mxu0 0.0
  %971 = vmatpush1.msra.mxu0 %v200
  %972 = vmatprep.subr.mxu0 0.0
  %973 = vmatpush1.msra.mxu0 %v199
  %974 = vmatprep.subr.mxu0 0.0
  %975 = vmatpush2.msra.mxu0 0.0
  %976 = vmatprep.subr.mxu0 0.0
  %977 = vmatpush2.msra.mxu0 0.0
  %978 = vmatprep.subr.mxu0 0.0
  %979 = vmatpush2.msra.mxu0 0.0
  %980 = vmatprep.subr.mxu0 0.0
  %981 = vmatpush2.msra.mxu0 0.0
  %982 = vmatprep.subr.mxu0 0.0
  %983 = vmatpush2.msra.mxu0 0.0
  %984 = vmatprep.subr.mxu0 0.0
  %985 = vmatpush2.msra.mxu0 0.0
  %986 = vmatprep.subr.mxu0 0.0
  %987 = vmatpush2.msra.mxu0 0.0
  %988 = vmatprep.subr.mxu0 0.0
  %989 = vmatpush2.msra.mxu0 0.0
  %990 = vmatprep.subr.mxu0 0.0
  %991 = vmatpush2.msra.mxu0 0.0
  %992 = vmatprep.subr.mxu0 0.0
  %993 = vmatpush2.msra.mxu0 0.0
  %994 = vmatprep.subr.mxu0 0.0
  %995 = vmatpush2.msra.mxu0 0.0
  %996 = vmatprep.subr.mxu0 0.0
  %997 = vmatpush2.msra.mxu0 0.0
  %998 = vmatprep.subr.mxu0 0.0
  %999 = vmatpush2.msra.mxu0 0.0
  %1000 = vmatprep.subr.mxu0 0.0
  %1001 = vmatpush2.msra.mxu0 0.0
  %1002 = vmatprep.subr.mxu0 0.0
  %1003 = vmatpush2.msra.mxu0 0.0
  %1004 = vmatprep.subr.mxu0 0.0
  %1005 = vmatpush2.msra.mxu0 0.0
  %1006 = vmatprep.mubr.f32.mxu0 0.0
  %1007 = vmatmul.mubr.f32.gmra.mxu0 %v940
  %v1008 = vpop.f32.mrf.mxu0
  %v1009 = vadd.f32 0.0, %v1008
  %v1010 = vpop.f32.mrf.mxu0
  %1011 = vdwg.mxu0
  %v1012 = vadd.f32 %v939, %v1009
  %v1013 = vxor.u32 %v1012, 2147483648
  %v1014 = vmul.f32 %v1013, 1.442695
  %v1015 = vpow.pop %v1014
  %v1016 = vadd.f32 %v1015, 1.0
  %v1017 = vrcp.pop %v1016
  %v1018 = vmul.f32 1.0, %v1017
  %v1019 = vtanh.pop %v1012
  %v1020 = vmul.f32 %v1018, %v925
  %1022 = vrot.lane.b32.xlu0 %v1019, 64
  %v1023 = vpop.permute.xlu0 %1022
  %v1025 = vmul.f32 %v1018, %v1023
  %1027 = vrot.lane.b32.xlu0 %v1025, 32
  %v1028 = vpop.permute.xlu0 %1027
  %v1030 = vadd.f32 %v1020, %v1028
  %v1031 = vtanh.pop %v1030
  %1033 = vrot.lane.b32.xlu0 %v1031, 64
  %v1034 = vpop.permute.xlu0 %1033
  %v1036 = vmul.f32 %v1018, %v1034
  %1038 = vrot.lane.b32.xlu0 %v1036, 32
  %v1039 = vpop.permute.xlu0 %1038
  %s1041 = scalar_lea.vmem [#allocation3], 56
  %1042 = vst.msk [vmem:[%s1041] sm:$0xff] %vm204, %v1039
  %v1043 = vld [vmem:[#allocation3] sm:$0xff]
  %v1044 = vld [vmem:[#allocation3 + $0x8] sm:$0xff]
  %v1045 = vld [vmem:[#allocation3 + $0x10] sm:$0xff]
  %v1046 = vld [vmem:[#allocation3 + $0x18] sm:$0xff]
  %v1047 = vld [vmem:[#allocation3 + $0x20] sm:$0xff]
  %v1048 = vld [vmem:[#allocation3 + $0x28] sm:$0xff]
  %v1049 = vld [vmem:[#allocation3 + $0x30] sm:$0xff]
  %v1050 = vld [vmem:[#allocation3 + $0x38] sm:$0xff]
  %v1051 = vld [vmem:[%s4] sm:$0xff]
  %v1052 = vld [vmem:[%s4 + $0x8] sm:$0xff]
  %v1053 = vld [vmem:[%s4 + $0x10] sm:$0xff]
  %v1054 = vld [vmem:[%s4 + $0x18] sm:$0xff]
  %v1055 = vld [vmem:[%s6] sm:$0x1]
  %v1057 = vlaneseq
  %v1058 = vshrl.u32 %v1057, 7
  %v1059 = vsub.s32 0, %v1058
  %v1060 = vrot.slane %v1055, %v1059
  %v1063 = vsel %vm204, %v1043, 0
  %v1066 = vsel %vm204, %v1044, 0
  %v1069 = vsel %vm204, %v1045, 0
  %v1072 = vsel %vm204, %v1046, 0
  %v1075 = vsel %vm204, %v1047, 0
  %v1078 = vsel %vm204, %v1048, 0
  %v1081 = vsel %vm204, %v1049, 0
  %v1084 = vsel %vm204, %v1050, 0
  %1086 = vmatprep.subr.mxu0 0.0
  %1087 = vmatpush1.msra.mxu0 0.0
  %1088 = vmatprep.subr.mxu0 0.0
  %1089 = vmatpush1.msra.mxu0 0.0
  %1090 = vmatprep.subr.mxu0 0.0
  %1091 = vmatpush1.msra.mxu0 0.0
  %1092 = vmatprep.subr.mxu0 0.0
  %1093 = vmatpush1.msra.mxu0 0.0
  %1094 = vmatprep.subr.mxu0 0.0
  %1095 = vmatpush1.msra.mxu0 0.0
  %1096 = vmatprep.subr.mxu0 0.0
  %1097 = vmatpush1.msra.mxu0 0.0
  %1098 = vmatprep.subr.mxu0 0.0
  %1099 = vmatpush1.msra.mxu0 0.0
  %1100 = vmatprep.subr.mxu0 0.0
  %1101 = vmatpush1.msra.mxu0 0.0
  %1102 = vmatprep.subr.mxu0 0.0
  %1103 = vmatpush1.msra.mxu0 0.0
  %1104 = vmatprep.subr.mxu0 0.0
  %1105 = vmatpush1.msra.mxu0 0.0
  %1106 = vmatprep.subr.mxu0 0.0
  %1107 = vmatpush1.msra.mxu0 0.0
  %1108 = vmatprep.subr.mxu0 0.0
  %1109 = vmatpush1.msra.mxu0 0.0
  %1110 = vmatprep.subr.mxu0 0.0
  %1111 = vmatpush1.msra.mxu0 %v1054
  %1112 = vmatprep.subr.mxu0 0.0
  %1113 = vmatpush1.msra.mxu0 %v1053
  %1114 = vmatprep.subr.mxu0 0.0
  %1115 = vmatpush1.msra.mxu0 %v1052
  %1116 = vmatprep.subr.mxu0 0.0
  %1117 = vmatpush1.msra.mxu0 %v1051
  %1118 = vmatprep.subr.mxu0 0.0
  %1119 = vmatpush2.msra.mxu0 0.0
  %1120 = vmatprep.subr.mxu0 0.0
  %1121 = vmatpush2.msra.mxu0 0.0
  %1122 = vmatprep.subr.mxu0 0.0
  %1123 = vmatpush2.msra.mxu0 0.0
  %1124 = vmatprep.subr.mxu0 0.0
  %1125 = vmatpush2.msra.mxu0 0.0
  %1126 = vmatprep.subr.mxu0 0.0
  %1127 = vmatpush2.msra.mxu0 0.0
  %1128 = vmatprep.subr.mxu0 0.0
  %1129 = vmatpush2.msra.mxu0 0.0
  %1130 = vmatprep.subr.mxu0 0.0
  %1131 = vmatpush2.msra.mxu0 0.0
  %1132 = vmatprep.subr.mxu0 0.0
  %1133 = vmatpush2.msra.mxu0 0.0
  %1134 = vmatprep.subr.mxu0 0.0
  %1135 = vmatpush2.msra.mxu0 0.0
  %1136 = vmatprep.subr.mxu0 0.0
  %1137 = vmatpush2.msra.mxu0 0.0
  %1138 = vmatprep.subr.mxu0 0.0
  %1139 = vmatpush2.msra.mxu0 0.0
  %1140 = vmatprep.subr.mxu0 0.0
  %1141 = vmatpush2.msra.mxu0 0.0
  %1142 = vmatprep.subr.mxu0 0.0
  %1143 = vmatpush2.msra.mxu0 0.0
  %1144 = vmatprep.subr.mxu0 0.0
  %1145 = vmatpush2.msra.mxu0 0.0
  %1146 = vmatprep.subr.mxu0 0.0
  %1147 = vmatpush2.msra.mxu0 0.0
  %1148 = vmatprep.subr.mxu0 0.0
  %1149 = vmatpush2.msra.mxu0 0.0
  %1150 = vmatprep.mubr.f32.mxu0 0.0
  %1151 = vmatmul.mubr.f32.gmra.mxu0 %v1063
  %v1152 = vpop.f32.mrf.mxu0
  %v1153 = vadd.f32 %v1060, %v1152
  %v1154 = vpop.f32.mrf.mxu0
  %1155 = vmatprep.mubr.f32.mxu0 0.0
  %1156 = vmatmul.mubr.f32.gmra.mxu0 %v1066
  %v1157 = vpop.f32.mrf.mxu0
  %v1158 = vadd.f32 %v1060, %v1157
  %v1159 = vpop.f32.mrf.mxu0
  %1160 = vmatprep.mubr.f32.mxu0 0.0
  %1161 = vmatmul.mubr.f32.gmra.mxu0 %v1069
  %v1162 = vpop.f32.mrf.mxu0
  %v1163 = vadd.f32 %v1060, %v1162
  %v1164 = vpop.f32.mrf.mxu0
  %1165 = vmatprep.mubr.f32.mxu0 0.0
  %1166 = vmatmul.mubr.f32.gmra.mxu0 %v1072
  %v1167 = vpop.f32.mrf.mxu0
  %v1168 = vadd.f32 %v1060, %v1167
  %v1169 = vpop.f32.mrf.mxu0
  %1170 = vmatprep.mubr.f32.mxu0 0.0
  %1171 = vmatmul.mubr.f32.gmra.mxu0 %v1075
  %v1172 = vpop.f32.mrf.mxu0
  %v1173 = vadd.f32 %v1060, %v1172
  %v1174 = vpop.f32.mrf.mxu0
  %1175 = vmatprep.mubr.f32.mxu0 0.0
  %1176 = vmatmul.mubr.f32.gmra.mxu0 %v1078
  %v1177 = vpop.f32.mrf.mxu0
  %v1178 = vadd.f32 %v1060, %v1177
  %v1179 = vpop.f32.mrf.mxu0
  %1180 = vmatprep.mubr.f32.mxu0 0.0
  %1181 = vmatmul.mubr.f32.gmra.mxu0 %v1081
  %v1182 = vpop.f32.mrf.mxu0
  %v1183 = vadd.f32 %v1060, %v1182
  %v1184 = vpop.f32.mrf.mxu0
  %1185 = vmatprep.mubr.f32.mxu0 0.0
  %1186 = vmatmul.mubr.f32.gmra.mxu0 %v1084
  %v1187 = vpop.f32.mrf.mxu0
  %v1188 = vadd.f32 %v1060, %v1187
  %v1189 = vpop.f32.mrf.mxu0
  %1190 = vdwg.mxu0
  %1191 = vst [vmem:[#allocation2] sm:$0xff] %v1153
  %1192 = vst [vmem:[#allocation2 + $0x8] sm:$0xff] %v1158
  %1193 = vst [vmem:[#allocation2 + $0x10] sm:$0xff] %v1163
  %1194 = vst [vmem:[#allocation2 + $0x18] sm:$0xff] %v1168
  %1195 = vst [vmem:[#allocation2 + $0x20] sm:$0xff] %v1173
  %1196 = vst [vmem:[#allocation2 + $0x28] sm:$0xff] %v1178
  %1197 = vst [vmem:[#allocation2 + $0x30] sm:$0xff] %v1183
  %1198 = vst [vmem:[#allocation2 + $0x38] sm:$0xff] %v1188
  %v1199 = vld [vmem:[%s5] sm:$0xff]
  %v1200 = vld [vmem:[%s5 + $0x8] sm:$0xff]
  %v1201 = vld [vmem:[%s5 + $0x10] sm:$0xff]
  %v1202 = vld [vmem:[%s5 + $0x18] sm:$0xff]
  %v1203 = vld [vmem:[#allocation2] sm:$0xff]
  %1204 = vmatprep.subr.mxu0 0.0
  %1205 = vmatpush1.msra.mxu0 0.0
  %1206 = vmatprep.subr.mxu0 0.0
  %1207 = vmatpush1.msra.mxu0 0.0
  %1208 = vmatprep.subr.mxu0 0.0
  %1209 = vmatpush1.msra.mxu0 0.0
  %1210 = vmatprep.subr.mxu0 0.0
  %1211 = vmatpush1.msra.mxu0 0.0
  %1212 = vmatprep.subr.mxu0 0.0
  %1213 = vmatpush1.msra.mxu0 0.0
  %1214 = vmatprep.subr.mxu0 0.0
  %1215 = vmatpush1.msra.mxu0 0.0
  %1216 = vmatprep.subr.mxu0 0.0
  %1217 = vmatpush1.msra.mxu0 0.0
  %1218 = vmatprep.subr.mxu0 0.0
  %1219 = vmatpush1.msra.mxu0 0.0
  %1220 = vmatprep.subr.mxu0 0.0
  %1221 = vmatpush1.msra.mxu0 0.0
  %1222 = vmatprep.subr.mxu0 0.0
  %1223 = vmatpush1.msra.mxu0 0.0
  %1224 = vmatprep.subr.mxu0 0.0
  %1225 = vmatpush1.msra.mxu0 0.0
  %1226 = vmatprep.subr.mxu0 0.0
  %1227 = vmatpush1.msra.mxu0 0.0
  %1228 = vmatprep.subr.mxu0 0.0
  %1229 = vmatpush1.msra.mxu0 %v1202
  %1230 = vmatprep.subr.mxu0 0.0
  %1231 = vmatpush1.msra.mxu0 %v1201
  %1232 = vmatprep.subr.mxu0 0.0
  %1233 = vmatpush1.msra.mxu0 %v1200
  %1234 = vmatprep.subr.mxu0 0.0
  %1235 = vmatpush1.msra.mxu0 %v1199
  %1236 = vmatprep.subr.mxu0 0.0
  %1237 = vmatpush2.msra.mxu0 0.0
  %1238 = vmatprep.subr.mxu0 0.0
  %1239 = vmatpush2.msra.mxu0 0.0
  %1240 = vmatprep.subr.mxu0 0.0
  %1241 = vmatpush2.msra.mxu0 0.0
  %1242 = vmatprep.subr.mxu0 0.0
  %1243 = vmatpush2.msra.mxu0 0.0
  %1244 = vmatprep.subr.mxu0 0.0
  %1245 = vmatpush2.msra.mxu0 0.0
  %1246 = vmatprep.subr.mxu0 0.0
  %1247 = vmatpush2.msra.mxu0 0.0
  %1248 = vmatprep.subr.mxu0 0.0
  %1249 = vmatpush2.msra.mxu0 0.0
  %1250 = vmatprep.subr.mxu0 0.0
  %1251 = vmatpush2.msra.mxu0 0.0
  %1252 = vmatprep.subr.mxu0 0.0
  %1253 = vmatpush2.msra.mxu0 0.0
  %1254 = vmatprep.subr.mxu0 0.0
  %1255 = vmatpush2.msra.mxu0 0.0
  %1256 = vmatprep.subr.mxu0 0.0
  %1257 = vmatpush2.msra.mxu0 0.0
  %1258 = vmatprep.subr.mxu0 0.0
  %1259 = vmatpush2.msra.mxu0 0.0
  %1260 = vmatprep.subr.mxu0 0.0
  %1261 = vmatpush2.msra.mxu0 0.0
  %1262 = vmatprep.subr.mxu0 0.0
  %1263 = vmatpush2.msra.mxu0 0.0
  %1264 = vmatprep.subr.mxu0 0.0
  %1265 = vmatpush2.msra.mxu0 0.0
  %1266 = vmatprep.subr.mxu0 0.0
  %1267 = vmatpush2.msra.mxu0 0.0
  %1268 = vmatprep.mubr.f32.mxu0 0.0
  %1269 = vmatmul.mubr.f32.gmra.mxu0 %v206
  %v1270 = vpop.f32.mrf.mxu0
  %v1271 = vadd.f32 0.0, %v1270
  %v1272 = vpop.f32.mrf.mxu0
  %1273 = vdwg.mxu0
  %v1274 = vadd.f32 %v1203, %v1271
  %v1275 = vxor.u32 %v1274, 2147483648
  %v1276 = vmul.f32 %v1275, 1.442695
  %v1277 = vpow.pop %v1276
  %v1278 = vadd.f32 %v1277, 1.0
  %v1279 = vrcp.pop %v1278
  %v1280 = vmul.f32 1.0, %v1279
  %v1281 = vtanh.pop %v1274
  %v1282 = vmul.f32 %v1280, 0.0
  %1284 = vrot.lane.b32.xlu0 %v1281, 64
  %v1285 = vpop.permute.xlu0 %1284
  %v1287 = vmul.f32 %v1280, %v1285
  %1289 = vrot.lane.b32.xlu0 %v1287, 32
  %v1290 = vpop.permute.xlu0 %1289
  %v1292 = vadd.f32 %v1282, %v1290
  %v1293 = vtanh.pop %v1292
  %1295 = vrot.lane.b32.xlu0 %v1293, 64
  %v1296 = vpop.permute.xlu0 %1295
  %v1298 = vmul.f32 %v1280, %v1296
  %v1299 = vld [vmem:[%s308] sm:$0xff]
  %1301 = vrot.lane.b32.xlu0 %v1298, 32
  %v1302 = vpop.permute.xlu0 %1301
  %v1303 = vsel %vm204, %v1302, 0
  %1305 = vmatprep.subr.mxu0 0.0
  %1306 = vmatpush1.msra.mxu0 0.0
  %1307 = vmatprep.subr.mxu0 0.0
  %1308 = vmatpush1.msra.mxu0 0.0
  %1309 = vmatprep.subr.mxu0 0.0
  %1310 = vmatpush1.msra.mxu0 0.0
  %1311 = vmatprep.subr.mxu0 0.0
  %1312 = vmatpush1.msra.mxu0 0.0
  %1313 = vmatprep.subr.mxu0 0.0
  %1314 = vmatpush1.msra.mxu0 0.0
  %1315 = vmatprep.subr.mxu0 0.0
  %1316 = vmatpush1.msra.mxu0 0.0
  %1317 = vmatprep.subr.mxu0 0.0
  %1318 = vmatpush1.msra.mxu0 0.0
  %1319 = vmatprep.subr.mxu0 0.0
  %1320 = vmatpush1.msra.mxu0 0.0
  %1321 = vmatprep.subr.mxu0 0.0
  %1322 = vmatpush1.msra.mxu0 0.0
  %1323 = vmatprep.subr.mxu0 0.0
  %1324 = vmatpush1.msra.mxu0 0.0
  %1325 = vmatprep.subr.mxu0 0.0
  %1326 = vmatpush1.msra.mxu0 0.0
  %1327 = vmatprep.subr.mxu0 0.0
  %1328 = vmatpush1.msra.mxu0 0.0
  %1329 = vmatprep.subr.mxu0 0.0
  %1330 = vmatpush1.msra.mxu0 %v1202
  %1331 = vmatprep.subr.mxu0 0.0
  %1332 = vmatpush1.msra.mxu0 %v1201
  %1333 = vmatprep.subr.mxu0 0.0
  %1334 = vmatpush1.msra.mxu0 %v1200
  %1335 = vmatprep.subr.mxu0 0.0
  %1336 = vmatpush1.msra.mxu0 %v1199
  %1337 = vmatprep.subr.mxu0 0.0
  %1338 = vmatpush2.msra.mxu0 0.0
  %1339 = vmatprep.subr.mxu0 0.0
  %1340 = vmatpush2.msra.mxu0 0.0
  %1341 = vmatprep.subr.mxu0 0.0
  %1342 = vmatpush2.msra.mxu0 0.0
  %1343 = vmatprep.subr.mxu0 0.0
  %1344 = vmatpush2.msra.mxu0 0.0
  %1345 = vmatprep.subr.mxu0 0.0
  %1346 = vmatpush2.msra.mxu0 0.0
  %1347 = vmatprep.subr.mxu0 0.0
  %1348 = vmatpush2.msra.mxu0 0.0
  %1349 = vmatprep.subr.mxu0 0.0
  %1350 = vmatpush2.msra.mxu0 0.0
  %1351 = vmatprep.subr.mxu0 0.0
  %1352 = vmatpush2.msra.mxu0 0.0
  %1353 = vmatprep.subr.mxu0 0.0
  %1354 = vmatpush2.msra.mxu0 0.0
  %1355 = vmatprep.subr.mxu0 0.0
  %1356 = vmatpush2.msra.mxu0 0.0
  %1357 = vmatprep.subr.mxu0 0.0
  %1358 = vmatpush2.msra.mxu0 0.0
  %1359 = vmatprep.subr.mxu0 0.0
  %1360 = vmatpush2.msra.mxu0 0.0
  %1361 = vmatprep.subr.mxu0 0.0
  %1362 = vmatpush2.msra.mxu0 0.0
  %1363 = vmatprep.subr.mxu0 0.0
  %1364 = vmatpush2.msra.mxu0 0.0
  %1365 = vmatprep.subr.mxu0 0.0
  %1366 = vmatpush2.msra.mxu0 0.0
  %1367 = vmatprep.subr.mxu0 0.0
  %1368 = vmatpush2.msra.mxu0 0.0
  %1369 = vmatprep.mubr.f32.mxu0 0.0
  %1370 = vmatmul.mubr.f32.gmra.mxu0 %v1303
  %v1371 = vpop.f32.mrf.mxu0
  %v1372 = vadd.f32 0.0, %v1371
  %v1373 = vpop.f32.mrf.mxu0
  %1374 = vdwg.mxu0
  %v1375 = vadd.f32 %v1299, %v1372
  %v1376 = vxor.u32 %v1375, 2147483648
  %v1377 = vmul.f32 %v1376, 1.442695
  %v1378 = vpow.pop %v1377
  %v1379 = vadd.f32 %v1378, 1.0
  %v1380 = vrcp.pop %v1379
  %v1381 = vmul.f32 1.0, %v1380
  %v1382 = vtanh.pop %v1375
  %v1383 = vmul.f32 %v1381, %v1292
  %1385 = vrot.lane.b32.xlu0 %v1382, 64
  %v1386 = vpop.permute.xlu0 %1385
  %v1388 = vmul.f32 %v1381, %v1386
  %1390 = vrot.lane.b32.xlu0 %v1388, 32
  %v1391 = vpop.permute.xlu0 %1390
  %v1393 = vadd.f32 %v1383, %v1391
  %v1394 = vtanh.pop %v1393
  %1396 = vrot.lane.b32.xlu0 %v1394, 64
  %v1397 = vpop.permute.xlu0 %1396
  %v1399 = vmul.f32 %v1381, %v1397
  %v1400 = vld [vmem:[%s413] sm:$0xff]
  %1402 = vrot.lane.b32.xlu0 %v1399, 32
  %v1403 = vpop.permute.xlu0 %1402
  %v1404 = vsel %vm204, %v1403, 0
  %1406 = vmatprep.subr.mxu0 0.0
  %1407 = vmatpush1.msra.mxu0 0.0
  %1408 = vmatprep.subr.mxu0 0.0
  %1409 = vmatpush1.msra.mxu0 0.0
  %1410 = vmatprep.subr.mxu0 0.0
  %1411 = vmatpush1.msra.mxu0 0.0
  %1412 = vmatprep.subr.mxu0 0.0
  %1413 = vmatpush1.msra.mxu0 0.0
  %1414 = vmatprep.subr.mxu0 0.0
  %1415 = vmatpush1.msra.mxu0 0.0
  %1416 = vmatprep.subr.mxu0 0.0
  %1417 = vmatpush1.msra.mxu0 0.0
  %1418 = vmatprep.subr.mxu0 0.0
  %1419 = vmatpush1.msra.mxu0 0.0
  %1420 = vmatprep.subr.mxu0 0.0
  %1421 = vmatpush1.msra.mxu0 0.0
  %1422 = vmatprep.subr.mxu0 0.0
  %1423 = vmatpush1.msra.mxu0 0.0
  %1424 = vmatprep.subr.mxu0 0.0
  %1425 = vmatpush1.msra.mxu0 0.0
  %1426 = vmatprep.subr.mxu0 0.0
  %1427 = vmatpush1.msra.mxu0 0.0
  %1428 = vmatprep.subr.mxu0 0.0
  %1429 = vmatpush1.msra.mxu0 0.0
  %1430 = vmatprep.subr.mxu0 0.0
  %1431 = vmatpush1.msra.mxu0 %v1202
  %1432 = vmatprep.subr.mxu0 0.0
  %1433 = vmatpush1.msra.mxu0 %v1201
  %1434 = vmatprep.subr.mxu0 0.0
  %1435 = vmatpush1.msra.mxu0 %v1200
  %1436 = vmatprep.subr.mxu0 0.0
  %1437 = vmatpush1.msra.mxu0 %v1199
  %1438 = vmatprep.subr.mxu0 0.0
  %1439 = vmatpush2.msra.mxu0 0.0
  %1440 = vmatprep.subr.mxu0 0.0
  %1441 = vmatpush2.msra.mxu0 0.0
  %1442 = vmatprep.subr.mxu0 0.0
  %1443 = vmatpush2.msra.mxu0 0.0
  %1444 = vmatprep.subr.mxu0 0.0
  %1445 = vmatpush2.msra.mxu0 0.0
  %1446 = vmatprep.subr.mxu0 0.0
  %1447 = vmatpush2.msra.mxu0 0.0
  %1448 = vmatprep.subr.mxu0 0.0
  %1449 = vmatpush2.msra.mxu0 0.0
  %1450 = vmatprep.subr.mxu0 0.0
  %1451 = vmatpush2.msra.mxu0 0.0
  %1452 = vmatprep.subr.mxu0 0.0
  %1453 = vmatpush2.msra.mxu0 0.0
  %1454 = vmatprep.subr.mxu0 0.0
  %1455 = vmatpush2.msra.mxu0 0.0
  %1456 = vmatprep.subr.mxu0 0.0
  %1457 = vmatpush2.msra.mxu0 0.0
  %1458 = vmatprep.subr.mxu0 0.0
  %1459 = vmatpush2.msra.mxu0 0.0
  %1460 = vmatprep.subr.mxu0 0.0
  %1461 = vmatpush2.msra.mxu0 0.0
  %1462 = vmatprep.subr.mxu0 0.0
  %1463 = vmatpush2.msra.mxu0 0.0
  %1464 = vmatprep.subr.mxu0 0.0
  %1465 = vmatpush2.msra.mxu0 0.0
  %1466 = vmatprep.subr.mxu0 0.0
  %1467 = vmatpush2.msra.mxu0 0.0
  %1468 = vmatprep.subr.mxu0 0.0
  %1469 = vmatpush2.msra.mxu0 0.0
  %1470 = vmatprep.mubr.f32.mxu0 0.0
  %1471 = vmatmul.mubr.f32.gmra.mxu0 %v1404
  %v1472 = vpop.f32.mrf.mxu0
  %v1473 = vadd.f32 0.0, %v1472
  %v1474 = vpop.f32.mrf.mxu0
  %1475 = vdwg.mxu0
  %v1476 = vadd.f32 %v1400, %v1473
  %v1477 = vxor.u32 %v1476, 2147483648
  %v1478 = vmul.f32 %v1477, 1.442695
  %v1479 = vpow.pop %v1478
  %v1480 = vadd.f32 %v1479, 1.0
  %v1481 = vrcp.pop %v1480
  %v1482 = vmul.f32 1.0, %v1481
  %v1483 = vtanh.pop %v1476
  %v1484 = vmul.f32 %v1482, %v1393
  %1486 = vrot.lane.b32.xlu0 %v1483, 64
  %v1487 = vpop.permute.xlu0 %1486
  %v1489 = vmul.f32 %v1482, %v1487
  %1491 = vrot.lane.b32.xlu0 %v1489, 32
  %v1492 = vpop.permute.xlu0 %1491
  %v1494 = vadd.f32 %v1484, %v1492
  %v1495 = vtanh.pop %v1494
  %1497 = vrot.lane.b32.xlu0 %v1495, 64
  %v1498 = vpop.permute.xlu0 %1497
  %v1500 = vmul.f32 %v1482, %v1498
  %v1501 = vld [vmem:[%s518] sm:$0xff]
  %1503 = vrot.lane.b32.xlu0 %v1500, 32
  %v1504 = vpop.permute.xlu0 %1503
  %v1505 = vsel %vm204, %v1504, 0
  %1507 = vmatprep.subr.mxu0 0.0
  %1508 = vmatpush1.msra.mxu0 0.0
  %1509 = vmatprep.subr.mxu0 0.0
  %1510 = vmatpush1.msra.mxu0 0.0
  %1511 = vmatprep.subr.mxu0 0.0
  %1512 = vmatpush1.msra.mxu0 0.0
  %1513 = vmatprep.subr.mxu0 0.0
  %1514 = vmatpush1.msra.mxu0 0.0
  %1515 = vmatprep.subr.mxu0 0.0
  %1516 = vmatpush1.msra.mxu0 0.0
  %1517 = vmatprep.subr.mxu0 0.0
  %1518 = vmatpush1.msra.mxu0 0.0
  %1519 = vmatprep.subr.mxu0 0.0
  %1520 = vmatpush1.msra.mxu0 0.0
  %1521 = vmatprep.subr.mxu0 0.0
  %1522 = vmatpush1.msra.mxu0 0.0
  %1523 = vmatprep.subr.mxu0 0.0
  %1524 = vmatpush1.msra.mxu0 0.0
  %1525 = vmatprep.subr.mxu0 0.0
  %1526 = vmatpush1.msra.mxu0 0.0
  %1527 = vmatprep.subr.mxu0 0.0
  %1528 = vmatpush1.msra.mxu0 0.0
  %1529 = vmatprep.subr.mxu0 0.0
  %1530 = vmatpush1.msra.mxu0 0.0
  %1531 = vmatprep.subr.mxu0 0.0
  %1532 = vmatpush1.msra.mxu0 %v1202
  %1533 = vmatprep.subr.mxu0 0.0
  %1534 = vmatpush1.msra.mxu0 %v1201
  %1535 = vmatprep.subr.mxu0 0.0
  %1536 = vmatpush1.msra.mxu0 %v1200
  %1537 = vmatprep.subr.mxu0 0.0
  %1538 = vmatpush1.msra.mxu0 %v1199
  %1539 = vmatprep.subr.mxu0 0.0
  %1540 = vmatpush2.msra.mxu0 0.0
  %1541 = vmatprep.subr.mxu0 0.0
  %1542 = vmatpush2.msra.mxu0 0.0
  %1543 = vmatprep.subr.mxu0 0.0
  %1544 = vmatpush2.msra.mxu0 0.0
  %1545 = vmatprep.subr.mxu0 0.0
  %1546 = vmatpush2.msra.mxu0 0.0
  %1547 = vmatprep.subr.mxu0 0.0
  %1548 = vmatpush2.msra.mxu0 0.0
  %1549 = vmatprep.subr.mxu0 0.0
  %1550 = vmatpush2.msra.mxu0 0.0
  %1551 = vmatprep.subr.mxu0 0.0
  %1552 = vmatpush2.msra.mxu0 0.0
  %1553 = vmatprep.subr.mxu0 0.0
  %1554 = vmatpush2.msra.mxu0 0.0
  %1555 = vmatprep.subr.mxu0 0.0
  %1556 = vmatpush2.msra.mxu0 0.0
  %1557 = vmatprep.subr.mxu0 0.0
  %1558 = vmatpush2.msra.mxu0 0.0
  %1559 = vmatprep.subr.mxu0 0.0
  %1560 = vmatpush2.msra.mxu0 0.0
  %1561 = vmatprep.subr.mxu0 0.0
  %1562 = vmatpush2.msra.mxu0 0.0
  %1563 = vmatprep.subr.mxu0 0.0
  %1564 = vmatpush2.msra.mxu0 0.0
  %1565 = vmatprep.subr.mxu0 0.0
  %1566 = vmatpush2.msra.mxu0 0.0
  %1567 = vmatprep.subr.mxu0 0.0
  %1568 = vmatpush2.msra.mxu0 0.0
  %1569 = vmatprep.subr.mxu0 0.0
  %1570 = vmatpush2.msra.mxu0 0.0
  %1571 = vmatprep.mubr.f32.mxu0 0.0
  %1572 = vmatmul.mubr.f32.gmra.mxu0 %v1505
  %v1573 = vpop.f32.mrf.mxu0
  %v1574 = vadd.f32 0.0, %v1573
  %v1575 = vpop.f32.mrf.mxu0
  %1576 = vdwg.mxu0
  %v1577 = vadd.f32 %v1501, %v1574
  %v1578 = vxor.u32 %v1577, 2147483648
  %v1579 = vmul.f32 %v1578, 1.442695
  %v1580 = vpow.pop %v1579
  %v1581 = vadd.f32 %v1580, 1.0
  %v1582 = vrcp.pop %v1581
  %v1583 = vmul.f32 1.0, %v1582
  %v1584 = vtanh.pop %v1577
  %v1585 = vmul.f32 %v1583, %v1494
  %1587 = vrot.lane.b32.xlu0 %v1584, 64
  %v1588 = vpop.permute.xlu0 %1587
  %v1590 = vmul.f32 %v1583, %v1588
  %1592 = vrot.lane.b32.xlu0 %v1590, 32
  %v1593 = vpop.permute.xlu0 %1592
  %v1595 = vadd.f32 %v1585, %v1593
  %v1596 = vtanh.pop %v1595
  %1598 = vrot.lane.b32.xlu0 %v1596, 64
  %v1599 = vpop.permute.xlu0 %1598
  %v1601 = vmul.f32 %v1583, %v1599
  %v1602 = vld [vmem:[%s623] sm:$0xff]
  %1604 = vrot.lane.b32.xlu0 %v1601, 32
  %v1605 = vpop.permute.xlu0 %1604
  %v1606 = vsel %vm204, %v1605, 0
  %1608 = vmatprep.subr.mxu0 0.0
  %1609 = vmatpush1.msra.mxu0 0.0
  %1610 = vmatprep.subr.mxu0 0.0
  %1611 = vmatpush1.msra.mxu0 0.0
  %1612 = vmatprep.subr.mxu0 0.0
  %1613 = vmatpush1.msra.mxu0 0.0
  %1614 = vmatprep.subr.mxu0 0.0
  %1615 = vmatpush1.msra.mxu0 0.0
  %1616 = vmatprep.subr.mxu0 0.0
  %1617 = vmatpush1.msra.mxu0 0.0
  %1618 = vmatprep.subr.mxu0 0.0
  %1619 = vmatpush1.msra.mxu0 0.0
  %1620 = vmatprep.subr.mxu0 0.0
  %1621 = vmatpush1.msra.mxu0 0.0
  %1622 = vmatprep.subr.mxu0 0.0
  %1623 = vmatpush1.msra.mxu0 0.0
  %1624 = vmatprep.subr.mxu0 0.0
  %1625 = vmatpush1.msra.mxu0 0.0
  %1626 = vmatprep.subr.mxu0 0.0
  %1627 = vmatpush1.msra.mxu0 0.0
  %1628 = vmatprep.subr.mxu0 0.0
  %1629 = vmatpush1.msra.mxu0 0.0
  %1630 = vmatprep.subr.mxu0 0.0
  %1631 = vmatpush1.msra.mxu0 0.0
  %1632 = vmatprep.subr.mxu0 0.0
  %1633 = vmatpush1.msra.mxu0 %v1202
  %1634 = vmatprep.subr.mxu0 0.0
  %1635 = vmatpush1.msra.mxu0 %v1201
  %1636 = vmatprep.subr.mxu0 0.0
  %1637 = vmatpush1.msra.mxu0 %v1200
  %1638 = vmatprep.subr.mxu0 0.0
  %1639 = vmatpush1.msra.mxu0 %v1199
  %1640 = vmatprep.subr.mxu0 0.0
  %1641 = vmatpush2.msra.mxu0 0.0
  %1642 = vmatprep.subr.mxu0 0.0
  %1643 = vmatpush2.msra.mxu0 0.0
  %1644 = vmatprep.subr.mxu0 0.0
  %1645 = vmatpush2.msra.mxu0 0.0
  %1646 = vmatprep.subr.mxu0 0.0
  %1647 = vmatpush2.msra.mxu0 0.0
  %1648 = vmatprep.subr.mxu0 0.0
  %1649 = vmatpush2.msra.mxu0 0.0
  %1650 = vmatprep.subr.mxu0 0.0
  %1651 = vmatpush2.msra.mxu0 0.0
  %1652 = vmatprep.subr.mxu0 0.0
  %1653 = vmatpush2.msra.mxu0 0.0
  %1654 = vmatprep.subr.mxu0 0.0
  %1655 = vmatpush2.msra.mxu0 0.0
  %1656 = vmatprep.subr.mxu0 0.0
  %1657 = vmatpush2.msra.mxu0 0.0
  %1658 = vmatprep.subr.mxu0 0.0
  %1659 = vmatpush2.msra.mxu0 0.0
  %1660 = vmatprep.subr.mxu0 0.0
  %1661 = vmatpush2.msra.mxu0 0.0
  %1662 = vmatprep.subr.mxu0 0.0
  %1663 = vmatpush2.msra.mxu0 0.0
  %1664 = vmatprep.subr.mxu0 0.0
  %1665 = vmatpush2.msra.mxu0 0.0
  %1666 = vmatprep.subr.mxu0 0.0
  %1667 = vmatpush2.msra.mxu0 0.0
  %1668 = vmatprep.subr.mxu0 0.0
  %1669 = vmatpush2.msra.mxu0 0.0
  %1670 = vmatprep.subr.mxu0 0.0
  %1671 = vmatpush2.msra.mxu0 0.0
  %1672 = vmatprep.mubr.f32.mxu0 0.0
  %1673 = vmatmul.mubr.f32.gmra.mxu0 %v1606
  %v1674 = vpop.f32.mrf.mxu0
  %v1675 = vadd.f32 0.0, %v1674
  %v1676 = vpop.f32.mrf.mxu0
  %1677 = vdwg.mxu0
  %v1678 = vadd.f32 %v1602, %v1675
  %v1679 = vxor.u32 %v1678, 2147483648
  %v1680 = vmul.f32 %v1679, 1.442695
  %v1681 = vpow.pop %v1680
  %v1682 = vadd.f32 %v1681, 1.0
  %v1683 = vrcp.pop %v1682
  %v1684 = vmul.f32 1.0, %v1683
  %v1685 = vtanh.pop %v1678
  %v1686 = vmul.f32 %v1684, %v1595
  %1688 = vrot.lane.b32.xlu0 %v1685, 64
  %v1689 = vpop.permute.xlu0 %1688
  %v1691 = vmul.f32 %v1684, %v1689
  %1693 = vrot.lane.b32.xlu0 %v1691, 32
  %v1694 = vpop.permute.xlu0 %1693
  %v1696 = vadd.f32 %v1686, %v1694
  %v1697 = vtanh.pop %v1696
  %1699 = vrot.lane.b32.xlu0 %v1697, 64
  %v1700 = vpop.permute.xlu0 %1699
  %v1702 = vmul.f32 %v1684, %v1700
  %v1703 = vld [vmem:[%s728] sm:$0xff]
  %1705 = vrot.lane.b32.xlu0 %v1702, 32
  %v1706 = vpop.permute.xlu0 %1705
  %v1707 = vsel %vm204, %v1706, 0
  %1709 = vmatprep.subr.mxu0 0.0
  %1710 = vmatpush1.msra.mxu0 0.0
  %1711 = vmatprep.subr.mxu0 0.0
  %1712 = vmatpush1.msra.mxu0 0.0
  %1713 = vmatprep.subr.mxu0 0.0
  %1714 = vmatpush1.msra.mxu0 0.0
  %1715 = vmatprep.subr.mxu0 0.0
  %1716 = vmatpush1.msra.mxu0 0.0
  %1717 = vmatprep.subr.mxu0 0.0
  %1718 = vmatpush1.msra.mxu0 0.0
  %1719 = vmatprep.subr.mxu0 0.0
  %1720 = vmatpush1.msra.mxu0 0.0
  %1721 = vmatprep.subr.mxu0 0.0
  %1722 = vmatpush1.msra.mxu0 0.0
  %1723 = vmatprep.subr.mxu0 0.0
  %1724 = vmatpush1.msra.mxu0 0.0
  %1725 = vmatprep.subr.mxu0 0.0
  %1726 = vmatpush1.msra.mxu0 0.0
  %1727 = vmatprep.subr.mxu0 0.0
  %1728 = vmatpush1.msra.mxu0 0.0
  %1729 = vmatprep.subr.mxu0 0.0
  %1730 = vmatpush1.msra.mxu0 0.0
  %1731 = vmatprep.subr.mxu0 0.0
  %1732 = vmatpush1.msra.mxu0 0.0
  %1733 = vmatprep.subr.mxu0 0.0
  %1734 = vmatpush1.msra.mxu0 %v1202
  %1735 = vmatprep.subr.mxu0 0.0
  %1736 = vmatpush1.msra.mxu0 %v1201
  %1737 = vmatprep.subr.mxu0 0.0
  %1738 = vmatpush1.msra.mxu0 %v1200
  %1739 = vmatprep.subr.mxu0 0.0
  %1740 = vmatpush1.msra.mxu0 %v1199
  %1741 = vmatprep.subr.mxu0 0.0
  %1742 = vmatpush2.msra.mxu0 0.0
  %1743 = vmatprep.subr.mxu0 0.0
  %1744 = vmatpush2.msra.mxu0 0.0
  %1745 = vmatprep.subr.mxu0 0.0
  %1746 = vmatpush2.msra.mxu0 0.0
  %1747 = vmatprep.subr.mxu0 0.0
  %1748 = vmatpush2.msra.mxu0 0.0
  %1749 = vmatprep.subr.mxu0 0.0
  %1750 = vmatpush2.msra.mxu0 0.0
  %1751 = vmatprep.subr.mxu0 0.0
  %1752 = vmatpush2.msra.mxu0 0.0
  %1753 = vmatprep.subr.mxu0 0.0
  %1754 = vmatpush2.msra.mxu0 0.0
  %1755 = vmatprep.subr.mxu0 0.0
  %1756 = vmatpush2.msra.mxu0 0.0
  %1757 = vmatprep.subr.mxu0 0.0
  %1758 = vmatpush2.msra.mxu0 0.0
  %1759 = vmatprep.subr.mxu0 0.0
  %1760 = vmatpush2.msra.mxu0 0.0
  %1761 = vmatprep.subr.mxu0 0.0
  %1762 = vmatpush2.msra.mxu0 0.0
  %1763 = vmatprep.subr.mxu0 0.0
  %1764 = vmatpush2.msra.mxu0 0.0
  %1765 = vmatprep.subr.mxu0 0.0
  %1766 = vmatpush2.msra.mxu0 0.0
  %1767 = vmatprep.subr.mxu0 0.0
  %1768 = vmatpush2.msra.mxu0 0.0
  %1769 = vmatprep.subr.mxu0 0.0
  %1770 = vmatpush2.msra.mxu0 0.0
  %1771 = vmatprep.subr.mxu0 0.0
  %1772 = vmatpush2.msra.mxu0 0.0
  %1773 = vmatprep.mubr.f32.mxu0 0.0
  %1774 = vmatmul.mubr.f32.gmra.mxu0 %v1707
  %v1775 = vpop.f32.mrf.mxu0
  %v1776 = vadd.f32 0.0, %v1775
  %v1777 = vpop.f32.mrf.mxu0
  %1778 = vdwg.mxu0
  %v1779 = vadd.f32 %v1703, %v1776
  %v1780 = vxor.u32 %v1779, 2147483648
  %v1781 = vmul.f32 %v1780, 1.442695
  %v1782 = vpow.pop %v1781
  %v1783 = vadd.f32 %v1782, 1.0
  %v1784 = vrcp.pop %v1783
  %v1785 = vmul.f32 1.0, %v1784
  %v1786 = vtanh.pop %v1779
  %v1787 = vmul.f32 %v1785, %v1696
  %1789 = vrot.lane.b32.xlu0 %v1786, 64
  %v1790 = vpop.permute.xlu0 %1789
  %v1792 = vmul.f32 %v1785, %v1790
  %1794 = vrot.lane.b32.xlu0 %v1792, 32
  %v1795 = vpop.permute.xlu0 %1794
  %v1797 = vadd.f32 %v1787, %v1795
  %v1798 = vtanh.pop %v1797
  %1800 = vrot.lane.b32.xlu0 %v1798, 64
  %v1801 = vpop.permute.xlu0 %1800
  %v1803 = vmul.f32 %v1785, %v1801
  %v1804 = vld [vmem:[%s833] sm:$0xff]
  %1806 = vrot.lane.b32.xlu0 %v1803, 32
  %v1807 = vpop.permute.xlu0 %1806
  %v1808 = vsel %vm204, %v1807, 0
  %1810 = vmatprep.subr.mxu0 0.0
  %1811 = vmatpush1.msra.mxu0 0.0
  %1812 = vmatprep.subr.mxu0 0.0
  %1813 = vmatpush1.msra.mxu0 0.0
  %1814 = vmatprep.subr.mxu0 0.0
  %1815 = vmatpush1.msra.mxu0 0.0
  %1816 = vmatprep.subr.mxu0 0.0
  %1817 = vmatpush1.msra.mxu0 0.0
  %1818 = vmatprep.subr.mxu0 0.0
  %1819 = vmatpush1.msra.mxu0 0.0
  %1820 = vmatprep.subr.mxu0 0.0
  %1821 = vmatpush1.msra.mxu0 0.0
  %1822 = vmatprep.subr.mxu0 0.0
  %1823 = vmatpush1.msra.mxu0 0.0
  %1824 = vmatprep.subr.mxu0 0.0
  %1825 = vmatpush1.msra.mxu0 0.0
  %1826 = vmatprep.subr.mxu0 0.0
  %1827 = vmatpush1.msra.mxu0 0.0
  %1828 = vmatprep.subr.mxu0 0.0
  %1829 = vmatpush1.msra.mxu0 0.0
  %1830 = vmatprep.subr.mxu0 0.0
  %1831 = vmatpush1.msra.mxu0 0.0
  %1832 = vmatprep.subr.mxu0 0.0
  %1833 = vmatpush1.msra.mxu0 0.0
  %1834 = vmatprep.subr.mxu0 0.0
  %1835 = vmatpush1.msra.mxu0 %v1202
  %1836 = vmatprep.subr.mxu0 0.0
  %1837 = vmatpush1.msra.mxu0 %v1201
  %1838 = vmatprep.subr.mxu0 0.0
  %1839 = vmatpush1.msra.mxu0 %v1200
  %1840 = vmatprep.subr.mxu0 0.0
  %1841 = vmatpush1.msra.mxu0 %v1199
  %1842 = vmatprep.subr.mxu0 0.0
  %1843 = vmatpush2.msra.mxu0 0.0
  %1844 = vmatprep.subr.mxu0 0.0
  %1845 = vmatpush2.msra.mxu0 0.0
  %1846 = vmatprep.subr.mxu0 0.0
  %1847 = vmatpush2.msra.mxu0 0.0
  %1848 = vmatprep.subr.mxu0 0.0
  %1849 = vmatpush2.msra.mxu0 0.0
  %1850 = vmatprep.subr.mxu0 0.0
  %1851 = vmatpush2.msra.mxu0 0.0
  %1852 = vmatprep.subr.mxu0 0.0
  %1853 = vmatpush2.msra.mxu0 0.0
  %1854 = vmatprep.subr.mxu0 0.0
  %1855 = vmatpush2.msra.mxu0 0.0
  %1856 = vmatprep.subr.mxu0 0.0
  %1857 = vmatpush2.msra.mxu0 0.0
  %1858 = vmatprep.subr.mxu0 0.0
  %1859 = vmatpush2.msra.mxu0 0.0
  %1860 = vmatprep.subr.mxu0 0.0
  %1861 = vmatpush2.msra.mxu0 0.0
  %1862 = vmatprep.subr.mxu0 0.0
  %1863 = vmatpush2.msra.mxu0 0.0
  %1864 = vmatprep.subr.mxu0 0.0
  %1865 = vmatpush2.msra.mxu0 0.0
  %1866 = vmatprep.subr.mxu0 0.0
  %1867 = vmatpush2.msra.mxu0 0.0
  %1868 = vmatprep.subr.mxu0 0.0
  %1869 = vmatpush2.msra.mxu0 0.0
  %1870 = vmatprep.subr.mxu0 0.0
  %1871 = vmatpush2.msra.mxu0 0.0
  %1872 = vmatprep.subr.mxu0 0.0
  %1873 = vmatpush2.msra.mxu0 0.0
  %1874 = vmatprep.mubr.f32.mxu0 0.0
  %1875 = vmatmul.mubr.f32.gmra.mxu0 %v1808
  %v1876 = vpop.f32.mrf.mxu0
  %v1877 = vadd.f32 0.0, %v1876
  %v1878 = vpop.f32.mrf.mxu0
  %1879 = vdwg.mxu0
  %v1880 = vadd.f32 %v1804, %v1877
  %v1881 = vxor.u32 %v1880, 2147483648
  %v1882 = vmul.f32 %v1881, 1.442695
  %v1883 = vpow.pop %v1882
  %v1884 = vadd.f32 %v1883, 1.0
  %v1885 = vrcp.pop %v1884
  %v1886 = vmul.f32 1.0, %v1885
  %v1887 = vtanh.pop %v1880
  %v1888 = vmul.f32 %v1886, %v1797
  %1890 = vrot.lane.b32.xlu0 %v1887, 64
  %v1891 = vpop.permute.xlu0 %1890
  %v1893 = vmul.f32 %v1886, %v1891
  %1895 = vrot.lane.b32.xlu0 %v1893, 32
  %v1896 = vpop.permute.xlu0 %1895
  %v1898 = vadd.f32 %v1888, %v1896
  %v1899 = vtanh.pop %v1898
  %1901 = vrot.lane.b32.xlu0 %v1899, 64
  %v1902 = vpop.permute.xlu0 %1901
  %v1904 = vmul.f32 %v1886, %v1902
  %v1905 = vld [vmem:[%s938] sm:$0xff]
  %1907 = vrot.lane.b32.xlu0 %v1904, 32
  %v1908 = vpop.permute.xlu0 %1907
  %v1909 = vsel %vm204, %v1908, 0
  %1911 = vmatprep.subr.mxu0 0.0
  %1912 = vmatpush1.msra.mxu0 0.0
  %1913 = vmatprep.subr.mxu0 0.0
  %1914 = vmatpush1.msra.mxu0 0.0
  %1915 = vmatprep.subr.mxu0 0.0
  %1916 = vmatpush1.msra.mxu0 0.0
  %1917 = vmatprep.subr.mxu0 0.0
  %1918 = vmatpush1.msra.mxu0 0.0
  %1919 = vmatprep.subr.mxu0 0.0
  %1920 = vmatpush1.msra.mxu0 0.0
  %1921 = vmatprep.subr.mxu0 0.0
  %1922 = vmatpush1.msra.mxu0 0.0
  %1923 = vmatprep.subr.mxu0 0.0
  %1924 = vmatpush1.msra.mxu0 0.0
  %1925 = vmatprep.subr.mxu0 0.0
  %1926 = vmatpush1.msra.mxu0 0.0
  %1927 = vmatprep.subr.mxu0 0.0
  %1928 = vmatpush1.msra.mxu0 0.0
  %1929 = vmatprep.subr.mxu0 0.0
  %1930 = vmatpush1.msra.mxu0 0.0
  %1931 = vmatprep.subr.mxu0 0.0
  %1932 = vmatpush1.msra.mxu0 0.0
  %1933 = vmatprep.subr.mxu0 0.0
  %1934 = vmatpush1.msra.mxu0 0.0
  %1935 = vmatprep.subr.mxu0 0.0
  %1936 = vmatpush1.msra.mxu0 %v1202
  %1937 = vmatprep.subr.mxu0 0.0
  %1938 = vmatpush1.msra.mxu0 %v1201
  %1939 = vmatprep.subr.mxu0 0.0
  %1940 = vmatpush1.msra.mxu0 %v1200
  %1941 = vmatprep.subr.mxu0 0.0
  %1942 = vmatpush1.msra.mxu0 %v1199
  %1943 = vmatprep.subr.mxu0 0.0
  %1944 = vmatpush2.msra.mxu0 0.0
  %1945 = vmatprep.subr.mxu0 0.0
  %1946 = vmatpush2.msra.mxu0 0.0
  %1947 = vmatprep.subr.mxu0 0.0
  %1948 = vmatpush2.msra.mxu0 0.0
  %1949 = vmatprep.subr.mxu0 0.0
  %1950 = vmatpush2.msra.mxu0 0.0
  %1951 = vmatprep.subr.mxu0 0.0
  %1952 = vmatpush2.msra.mxu0 0.0
  %1953 = vmatprep.subr.mxu0 0.0
  %1954 = vmatpush2.msra.mxu0 0.0
  %1955 = vmatprep.subr.mxu0 0.0
  %1956 = vmatpush2.msra.mxu0 0.0
  %1957 = vmatprep.subr.mxu0 0.0
  %1958 = vmatpush2.msra.mxu0 0.0
  %1959 = vmatprep.subr.mxu0 0.0
  %1960 = vmatpush2.msra.mxu0 0.0
  %1961 = vmatprep.subr.mxu0 0.0
  %1962 = vmatpush2.msra.mxu0 0.0
  %1963 = vmatprep.subr.mxu0 0.0
  %1964 = vmatpush2.msra.mxu0 0.0
  %1965 = vmatprep.subr.mxu0 0.0
  %1966 = vmatpush2.msra.mxu0 0.0
  %1967 = vmatprep.subr.mxu0 0.0
  %1968 = vmatpush2.msra.mxu0 0.0
  %1969 = vmatprep.subr.mxu0 0.0
  %1970 = vmatpush2.msra.mxu0 0.0
  %1971 = vmatprep.subr.mxu0 0.0
  %1972 = vmatpush2.msra.mxu0 0.0
  %1973 = vmatprep.subr.mxu0 0.0
  %1974 = vmatpush2.msra.mxu0 0.0
  %1975 = vmatprep.mubr.f32.mxu0 0.0
  %1976 = vmatmul.mubr.f32.gmra.mxu0 %v1909
  %v1977 = vpop.f32.mrf.mxu0
  %v1978 = vadd.f32 0.0, %v1977
  %v1979 = vpop.f32.mrf.mxu0
  %1980 = vdwg.mxu0
  %v1981 = vadd.f32 %v1905, %v1978
  %v1982 = vxor.u32 %v1981, 2147483648
  %v1983 = vmul.f32 %v1982, 1.442695
  %v1984 = vpow.pop %v1983
  %v1985 = vadd.f32 %v1984, 1.0
  %v1986 = vrcp.pop %v1985
  %v1987 = vmul.f32 1.0, %v1986
  %v1988 = vtanh.pop %v1981
  %v1989 = vmul.f32 %v1987, %v1898
  %1991 = vrot.lane.b32.xlu0 %v1988, 64
  %v1992 = vpop.permute.xlu0 %1991
  %v1994 = vmul.f32 %v1987, %v1992
  %1996 = vrot.lane.b32.xlu0 %v1994, 32
  %v1997 = vpop.permute.xlu0 %1996
  %v1999 = vadd.f32 %v1989, %v1997
  %v2000 = vtanh.pop %v1999
  %2002 = vrot.lane.b32.xlu0 %v2000, 64
  %v2003 = vpop.permute.xlu0 %2002
  %v2005 = vmul.f32 %v1987, %v2003
  %v2006 = vld [vmem:[%s10] sm:$0x1]
  %v2007 = vadd.f32 %v2006, 1e-05
  %v2008 = vrsqrt.pop %v2007
  %v2009 = vld [vmem:[%s9] sm:$0x1]
  %v2011 = vlaneseq
  %v2012 = vshrl.u32 %v2011, 7
  %v2013 = vsub.s32 0, %v2012
  %v2014 = vrot.slane %v2009, %v2013
  %2015 = vrot.lane.b32.xlu0 %v2014, 96
  %v2016 = vpop.permute.xlu0 %2015
  %v2018 = vsub.f32 %v2005, %v2016
  %v2020 = vlaneseq
  %v2021 = vshrl.u32 %v2020, 7
  %v2022 = vsub.s32 0, %v2021
  %v2023 = vrot.slane %v2008, %v2022
  %2024 = vrot.lane.b32.xlu0 %v2023, 96
  %v2025 = vpop.permute.xlu0 %2024
  %v2027 = vmul.f32 %v2018, %v2025
  %v2028 = vld [vmem:[%s7] sm:$0x1]
  %v2030 = vlaneseq
  %v2031 = vshrl.u32 %v2030, 7
  %v2032 = vsub.s32 0, %v2031
  %v2033 = vrot.slane %v2028, %v2032
  %2034 = vrot.lane.b32.xlu0 %v2033, 96
  %v2035 = vpop.permute.xlu0 %2034
  %v2037 = vmul.f32 %v2027, %v2035
  %v2038 = vld [vmem:[%s8] sm:$0x1]
  %v2040 = vlaneseq
  %v2041 = vshrl.u32 %v2040, 7
  %v2042 = vsub.s32 0, %v2041
  %v2043 = vrot.slane %v2038, %v2042
  %2044 = vrot.lane.b32.xlu0 %v2043, 96
  %v2045 = vpop.permute.xlu0 %2044
  %v2047 = vadd.f32 %v2037, %v2045
  %v2048 = vld [vmem:[%s11] sm:$0xff]
  %v2049 = vld [vmem:[%s11 + $0x8] sm:$0xff]
  %v2050 = vld [vmem:[%s11 + $0x10] sm:$0xff]
  %v2051 = vld [vmem:[%s11 + $0x18] sm:$0xff]
  %v2052 = vld [vmem:[%s12] sm:$0x1]
  %v2054 = vlaneseq
  %v2055 = vshrl.u32 %v2054, 7
  %v2056 = vsub.s32 0, %v2055
  %v2057 = vrot.slane %v2052, %v2056
  %2060 = vrot.lane.b32.xlu0 %v2047, 32
  %v2061 = vpop.permute.xlu0 %2060
  %v2062 = vsel %vm204, %v2061, 0
  %2064 = vmatprep.subr.mxu0 0.0
  %2065 = vmatpush1.msra.mxu0 0.0
  %2066 = vmatprep.subr.mxu0 0.0
  %2067 = vmatpush1.msra.mxu0 0.0
  %2068 = vmatprep.subr.mxu0 0.0
  %2069 = vmatpush1.msra.mxu0 0.0
  %2070 = vmatprep.subr.mxu0 0.0
  %2071 = vmatpush1.msra.mxu0 0.0
  %2072 = vmatprep.subr.mxu0 0.0
  %2073 = vmatpush1.msra.mxu0 0.0
  %2074 = vmatprep.subr.mxu0 0.0
  %2075 = vmatpush1.msra.mxu0 0.0
  %2076 = vmatprep.subr.mxu0 0.0
  %2077 = vmatpush1.msra.mxu0 0.0
  %2078 = vmatprep.subr.mxu0 0.0
  %2079 = vmatpush1.msra.mxu0 0.0
  %2080 = vmatprep.subr.mxu0 0.0
  %2081 = vmatpush1.msra.mxu0 0.0
  %2082 = vmatprep.subr.mxu0 0.0
  %2083 = vmatpush1.msra.mxu0 0.0
  %2084 = vmatprep.subr.mxu0 0.0
  %2085 = vmatpush1.msra.mxu0 0.0
  %2086 = vmatprep.subr.mxu0 0.0
  %2087 = vmatpush1.msra.mxu0 0.0
  %2088 = vmatprep.subr.mxu0 0.0
  %2089 = vmatpush1.msra.mxu0 %v2051
  %2090 = vmatprep.subr.mxu0 0.0
  %2091 = vmatpush1.msra.mxu0 %v2050
  %2092 = vmatprep.subr.mxu0 0.0
  %2093 = vmatpush1.msra.mxu0 %v2049
  %2094 = vmatprep.subr.mxu0 0.0
  %2095 = vmatpush1.msra.mxu0 %v2048
  %2096 = vmatprep.subr.mxu0 0.0
  %2097 = vmatpush2.msra.mxu0 0.0
  %2098 = vmatprep.subr.mxu0 0.0
  %2099 = vmatpush2.msra.mxu0 0.0
  %2100 = vmatprep.subr.mxu0 0.0
  %2101 = vmatpush2.msra.mxu0 0.0
  %2102 = vmatprep.subr.mxu0 0.0
  %2103 = vmatpush2.msra.mxu0 0.0
  %2104 = vmatprep.subr.mxu0 0.0
  %2105 = vmatpush2.msra.mxu0 0.0
  %2106 = vmatprep.subr.mxu0 0.0
  %2107 = vmatpush2.msra.mxu0 0.0
  %2108 = vmatprep.subr.mxu0 0.0
  %2109 = vmatpush2.msra.mxu0 0.0
  %2110 = vmatprep.subr.mxu0 0.0
  %2111 = vmatpush2.msra.mxu0 0.0
  %2112 = vmatprep.subr.mxu0 0.0
  %2113 = vmatpush2.msra.mxu0 0.0
  %2114 = vmatprep.subr.mxu0 0.0
  %2115 = vmatpush2.msra.mxu0 0.0
  %2116 = vmatprep.subr.mxu0 0.0
  %2117 = vmatpush2.msra.mxu0 0.0
  %2118 = vmatprep.subr.mxu0 0.0
  %2119 = vmatpush2.msra.mxu0 0.0
  %2120 = vmatprep.subr.mxu0 0.0
  %2121 = vmatpush2.msra.mxu0 0.0
  %2122 = vmatprep.subr.mxu0 0.0
  %2123 = vmatpush2.msra.mxu0 0.0
  %2124 = vmatprep.subr.mxu0 0.0
  %2125 = vmatpush2.msra.mxu0 0.0
  %2126 = vmatprep.subr.mxu0 0.0
  %2127 = vmatpush2.msra.mxu0 0.0
  %2128 = vmatprep.mubr.f32.mxu0 0.0
  %2129 = vmatmul.mubr.f32.gmra.mxu0 %v2062
  %v2130 = vpop.f32.mrf.mxu0
  %v2131 = vadd.f32 %v2057, %v2130
  %v2132 = vpop.f32.mrf.mxu0
  %2133 = vdwg.mxu0
  %vm2134 = vcmask 31744
  %2135 = vst.msk [vmem:[%s13] sm:$0xff] %vm2134, %v2131
  // Predicated region
  $region54: #{lstm_model_forward.1} parent=0 // pred_check
    _
  $region55: #{lstm_model_forward.1} parent=0 // pred_check_branch
    %2137 = sbr.rel (0) target = $region57
  $region56: #{lstm_model_forward.1} parent=0 // pred_region
    _
  $region57: #{lstm_model_forward.1} parent=0 // pred_fallthru
    _
  // Predicated region
  $region58: #{lstm_model_forward.1} parent=0 // pred_check
    _
  $region59: #{lstm_model_forward.1} parent=0 // pred_check_branch
    %2139 = sbr.rel (0) target = $region61
  $region60: #{lstm_model_forward.1} parent=0 // pred_region
    _
  $region61: #{lstm_model_forward.1} parent=0 // pred_fallthru
    _

</llo_original>
